<compile_context>
chip_gen: v7x
topology: tpu7x:2x2x1
jax: 0.10.0
libtpu: 0.0.40
codegen_flags: <defaults>
</compile_context>

<pallas_src>
import functools
import math

import jax
import jax.numpy as jnp
from jax.experimental import pallas as pl
from jax.experimental.pallas import tpu as pltpu


def sine_pos_kernel(mask_ref, tri_h_ref, tri_w_ref, sel_ref, pick_ref,
                    inv_dim_t_ref, phase_ref, out_ref, *, D, scale, normalize):
    # mask_ref : (1, H, W)  float32 {0,1} mask for one batch element
    # tri_h    : (H, H)     tri_h[i, c] = (c <= i)        -> row cumsum
    # tri_w    : (W, W)     tri_w[k, l] = (k <= l)        -> col cumsum
    # sel      : (W, HW)    sel[w, j]   = (w == j % W)    -> lane scatter
    # pick     : (H, HW)    pick[h, j]  = (h == j // W)   -> row pick
    # inv_dim_t: (D, 1)     1 / dim_t
    # phase    : (D, 1)     0 for even channel, pi/2 for odd channel
    # out_ref  : (1, 2*D, HW) float32, NCHW-contiguous (channels, h*W+w)
    H = mask_ref.shape[1]
    W = mask_ref.shape[2]
    m = mask_ref[0]  # (H, W)

    # --- cumsums on the MXU (small-integer valued -> exact) ---
    y_embed = jnp.dot(tri_h_ref[...], m, preferred_element_type=jnp.float32)  # (H, W)
    x_embed = jnp.dot(m, tri_w_ref[...], preferred_element_type=jnp.float32)  # (H, W)

    # --- row-major flatten (H, W) -> (1, H*W) via 0/1 selection matmul + sublane sum ---
    sel = sel_ref[...]    # (W, HW)
    pick = pick_ref[...]  # (H, HW)
    y_sel = jnp.dot(y_embed, sel, preferred_element_type=jnp.float32)  # (H, HW): y_embed[h, j%W]
    x_sel = jnp.dot(x_embed, sel, preferred_element_type=jnp.float32)  # (H, HW): x_embed[h, j%W]
    y_flat = jnp.sum(pick * y_sel, axis=0, keepdims=True)  # (1, HW): y_embed[j//W, j%W]
    x_flat = jnp.sum(pick * x_sel, axis=0, keepdims=True)  # (1, HW): x_embed[j//W, j%W]

    if normalize:
        # denominators, also in flat form (no reshape needed):
        den_y = y_sel[H - 1:H, :]                                              # y_embed[H-1, j%W]
        den_x = jnp.sum(pick * x_embed[:, W - 1:W], axis=0, keepdims=True)     # x_embed[j//W, W-1]
        # same op order as the reference; only (1, HW)-sized divides
        y_flat = y_flat / (den_y + 1e-6) * scale
        x_flat = x_flat / (den_x + 1e-6) * scale

    inv_dim_t = inv_dim_t_ref[...]  # (D, 1)
    phase = phase_ref[...]          # (D, 1)

    # One sin per output element:
    #   even channel 2k  : sin(v * inv_dim_t[2k])
    #   odd  channel 2k+1: sin(v * inv_dim_t[2k+1] + pi/2) == cos(v * inv_dim_t[2k+1])
    out_ref[0, 0:D, :] = jnp.sin(y_flat * inv_dim_t + phase)        # pos_y -> channels [0, D)
    out_ref[0, D:2 * D, :] = jnp.sin(x_flat * inv_dim_t + phase)    # pos_x -> channels [D, 2D)


def sine_position_embedding(pixel_values, pixel_mask, *, d_model, temperature,
                            normalize=True, scale=None):
    """Matches SinePositionEmbedding.forward. Returns (B, 2*(d_model//2), H, W) f32."""
    del pixel_values  # only used for device/dtype in the torch module
    if pixel_mask is None:
        raise ValueError("No pixel mask provided")
    if scale is not None and normalize is False:
        raise ValueError("normalize should be True if scale is passed")
    if scale is None:
        scale = 2 * math.pi

    B, H, W = pixel_mask.shape
    D = d_model // 2
    HW = H * W
    mask_f = pixel_mask.astype(jnp.float32)

    # ---- constants, built once in the wrapper; DMA'd into VMEM once (constant index_map) ----
    r_h = jnp.arange(H, dtype=jnp.int32)
    r_w = jnp.arange(W, dtype=jnp.int32)
    j = jnp.arange(HW, dtype=jnp.int32)
    tri_h = (r_h[None, :] <= r_h[:, None]).astype(jnp.float32)        # (H, H) lower tri incl diag
    tri_w = (r_w[:, None] <= r_w[None, :]).astype(jnp.float32)        # (W, W) upper tri incl diag
    sel = (r_w[:, None] == (j[None, :] % W)).astype(jnp.float32)      # (W, HW)
    pick = (r_h[:, None] == (j[None, :] // W)).astype(jnp.float32)    # (H, HW)

    d_idx = jnp.arange(D, dtype=jnp.float32)
    dim_t = jnp.asarray(temperature, jnp.float32) ** (2.0 * jnp.floor(d_idx / 2.0) / D)
    inv_dim_t = (1.0 / dim_t)[:, None]                                # (D, 1)
    phase = ((jnp.arange(D) % 2).astype(jnp.float32) * (math.pi / 2.0))[:, None]  # (D, 1)

    kernel = functools.partial(sine_pos_kernel, D=D, scale=float(scale),
                               normalize=normalize)

    pos_flat = pl.pallas_call(
        kernel,
        out_shape=jax.ShapeDtypeStruct((B, 2 * D, HW), jnp.float32),
        grid_spec=pltpu.PrefetchScalarGridSpec(
            num_scalar_prefetch=0,
            grid=(B,),
            in_specs=[
                pl.BlockSpec((1, H, W), lambda b: (b, 0, 0)),     # mask, per batch element
                pl.BlockSpec((H, H), lambda b: (0, 0)),           # tri_h   (fetched once)
                pl.BlockSpec((W, W), lambda b: (0, 0)),           # tri_w
                pl.BlockSpec((W, HW), lambda b: (0, 0)),          # sel
                pl.BlockSpec((H, HW), lambda b: (0, 0)),          # pick
                pl.BlockSpec((D, 1), lambda b: (0, 0)),           # inv_dim_t
                pl.BlockSpec((D, 1), lambda b: (0, 0)),           # phase
            ],
            out_specs=pl.BlockSpec((1, 2 * D, HW), lambda b: (b, 0, 0)),
        ),
        compiler_params=pltpu.CompilerParams(
            dimension_semantics=("parallel",),
            vmem_limit_bytes=32 * 1024 * 1024,
        ),
    )(mask_f, tri_h, tri_w, sel, pick, inv_dim_t, phase)

    # metadata-only reshape: (B, 2D, H*W) is already NCHW-contiguous
    return pos_flat.reshape(B, 2 * D, H, W)


def _reference(pixel_mask, *, d_model, temperature, scale=2 * math.pi):
    """Pure-JAX port of the PyTorch forward for verification."""
    D = d_model // 2
    mask = pixel_mask.astype(jnp.float32)
    y_embed = jnp.cumsum(mask, axis=1)
    x_embed = jnp.cumsum(mask, axis=2)
    y_embed = y_embed / (y_embed[:, -1:, :] + 1e-6) * scale
    x_embed = x_embed / (x_embed[:, :, -1:] + 1e-6) * scale
    dim_t = jnp.arange(D, dtype=jnp.float32)
    dim_t = temperature ** (2 * jnp.floor(dim_t / 2) / D)
    pos_x = x_embed[:, :, :, None] / dim_t
    pos_y = y_embed[:, :, :, None] / dim_t
    B, H, W = mask.shape
    pos_x = jnp.stack((jnp.sin(pos_x[..., 0::2]), jnp.cos(pos_x[..., 1::2])),
                      axis=4).reshape(B, H, W, D)
    pos_y = jnp.stack((jnp.sin(pos_y[..., 0::2]), jnp.cos(pos_y[..., 1::2])),
                      axis=4).reshape(B, H, W, D)
    pos = jnp.concatenate((pos_y, pos_x), axis=3).transpose(0, 3, 1, 2)
    return pos


if __name__ == "__main__":
    # Small config consistent with the module: d_model=32 -> embedding_dim=16
    B, C, H, W = 2, 4, 16, 16
    d_model = 32
    temperature = 10000.0

    key = jax.random.PRNGKey(0)
    k1, k2, k3 = jax.random.split(key, 3)

    # NCHW pixel_values (only used for device/dtype in the torch module)
    pixel_values = jax.random.normal(k1, (B, C, H, W), jnp.float32)

    # DETR-style padded-rectangle pixel mask (1 = valid pixel, 0 = padding)
    h_valid = jax.random.randint(k2, (B,), H // 2, H + 1)
    w_valid = jax.random.randint(k3, (B,), W // 2, W + 1)
    rows = jnp.arange(H)[None, :, None]
    cols = jnp.arange(W)[None, None, :]
    pixel_mask = ((rows < h_valid[:, None, None]) &
                  (cols < w_valid[:, None, None])).astype(jnp.int32)

    out = sine_position_embedding(pixel_values, pixel_mask,
                                  d_model=d_model, temperature=temperature)
    out = jax.block_until_ready(out)

    ref = _reference(pixel_mask, d_model=d_model, temperature=temperature)
    assert out.shape == (B, d_model, H, W), out.shape
    assert jnp.allclose(out, ref, atol=1e-5, rtol=1e-5), float(jnp.max(jnp.abs(out - ref)))

    print("KERNEL_OK")
</pallas_src>

<mosaic_0001>
module attributes {stable_mosaic.version = 11 : i64} {
  func.func @sine_pos_kernel(%arg0: i32, %arg1: memref<1x16x16xf32, #tpu.memory_space<vmem>>, %arg2: memref<16x16xf32, #tpu.memory_space<vmem>>, %arg3: memref<16x16xf32, #tpu.memory_space<vmem>>, %arg4: memref<16x256xf32, #tpu.memory_space<vmem>>, %arg5: memref<16x256xf32, #tpu.memory_space<vmem>>, %arg6: memref<16x1xf32, #tpu.memory_space<vmem>>, %arg7: memref<16x1xf32, #tpu.memory_space<vmem>>, %arg8: memref<1x32x256xf32, #tpu.memory_space<vmem>>) attributes {dimension_semantics = [#tpu.dimension_semantics<parallel>], iteration_bounds = array<i64: 2>, scalar_prefetch = 0 : i64, scratch_operands = 0 : i64, tpu.core_type = #tpu.core_type<tc>, window_params = [{transform_indices = @transform_0, window_bounds = array<i64: 1, 16, 16>}, {pipeline_mode = #tpu.pipeline_mode<synchronous>, transform_indices = @transform_1, window_bounds = array<i64: 16, 16>}, {pipeline_mode = #tpu.pipeline_mode<synchronous>, transform_indices = @transform_2, window_bounds = array<i64: 16, 16>}, {pipeline_mode = #tpu.pipeline_mode<synchronous>, transform_indices = @transform_3, window_bounds = array<i64: 16, 256>}, {pipeline_mode = #tpu.pipeline_mode<synchronous>, transform_indices = @transform_4, window_bounds = array<i64: 16, 256>}, {pipeline_mode = #tpu.pipeline_mode<synchronous>, transform_indices = @transform_5, window_bounds = array<i64: 16, 1>}, {pipeline_mode = #tpu.pipeline_mode<synchronous>, transform_indices = @transform_6, window_bounds = array<i64: 16, 1>}, {transform_indices = @transform_7, window_bounds = array<i64: 1, 32, 256>}]} {
    %c0 = arith.constant 0 : index
    %c0_0 = arith.constant 0 : index
    %c0_1 = arith.constant 0 : index
    %0 = vector.load %arg1[%c0, %c0_0, %c0_1] : memref<1x16x16xf32, #tpu.memory_space<vmem>>, vector<1x16x16xf32>
    %1 = vector.shape_cast %0 : vector<1x16x16xf32> to vector<16x16xf32>
    %c0_2 = arith.constant 0 : index
    %c0_3 = arith.constant 0 : index
    %2 = vector.load %arg2[%c0_2, %c0_3] : memref<16x16xf32, #tpu.memory_space<vmem>>, vector<16x16xf32>
    %cst = arith.constant dense<0.000000e+00> : vector<16x16xf32>
    %3 = tpu.matmul %2, %1, %cst {dimension_numbers = #tpu.dot_dimension_numbers<[1], [0], [0], [1], [0, 0, 1, 1], [], []>} : vector<16x16xf32>, vector<16x16xf32>, vector<16x16xf32> -> vector<16x16xf32>
    %c0_4 = arith.constant 0 : index
    %c0_5 = arith.constant 0 : index
    %4 = vector.load %arg3[%c0_4, %c0_5] : memref<16x16xf32, #tpu.memory_space<vmem>>, vector<16x16xf32>
    %cst_6 = arith.constant dense<0.000000e+00> : vector<16x16xf32>
    %5 = tpu.matmul %1, %4, %cst_6 {dimension_numbers = #tpu.dot_dimension_numbers<[1], [0], [0], [1], [0, 0, 1, 1], [], []>} : vector<16x16xf32>, vector<16x16xf32>, vector<16x16xf32> -> vector<16x16xf32>
    %c0_7 = arith.constant 0 : index
    %c0_8 = arith.constant 0 : index
    %6 = vector.load %arg4[%c0_7, %c0_8] : memref<16x256xf32, #tpu.memory_space<vmem>>, vector<16x256xf32>
    %c0_9 = arith.constant 0 : index
    %c0_10 = arith.constant 0 : index
    %7 = vector.load %arg5[%c0_9, %c0_10] : memref<16x256xf32, #tpu.memory_space<vmem>>, vector<16x256xf32>
    %cst_11 = arith.constant dense<0.000000e+00> : vector<16x256xf32>
    %8 = tpu.matmul %3, %6, %cst_11 {dimension_numbers = #tpu.dot_dimension_numbers<[1], [0], [0], [1], [0, 0, 1, 1], [], []>} : vector<16x16xf32>, vector<16x256xf32>, vector<16x256xf32> -> vector<16x256xf32>
    %cst_12 = arith.constant dense<0.000000e+00> : vector<16x256xf32>
    %9 = tpu.matmul %5, %6, %cst_12 {dimension_numbers = #tpu.dot_dimension_numbers<[1], [0], [0], [1], [0, 0, 1, 1], [], []>} : vector<16x16xf32>, vector<16x256xf32>, vector<16x256xf32> -> vector<16x256xf32>
    %10 = arith.mulf %7, %8 : vector<16x256xf32>
    %cst_13 = arith.constant dense<0.000000e+00> : vector<256xf32>
    %11 = vector.multi_reduction <add>, %10, %cst_13 [0] : vector<16x256xf32> to vector<256xf32>
    %12 = vector.shape_cast %11 : vector<256xf32> to vector<1x256xf32>
    %13 = arith.mulf %7, %9 : vector<16x256xf32>
    %cst_14 = arith.constant dense<0.000000e+00> : vector<256xf32>
    %14 = vector.multi_reduction <add>, %13, %cst_14 [0] : vector<16x256xf32> to vector<256xf32>
    %15 = vector.shape_cast %14 : vector<256xf32> to vector<1x256xf32>
    %16 = vector.extract_strided_slice %8 {offsets = [15, 0], sizes = [1, 256], strides = [1, 1]} : vector<16x256xf32> to vector<1x256xf32>
    %17 = vector.extract_strided_slice %5 {offsets = [0, 15], sizes = [16, 1], strides = [1, 1]} : vector<16x16xf32> to vector<16x1xf32>
    %18 = vector.broadcast %17 : vector<16x1xf32> to vector<16x256xf32>
    %19 = arith.mulf %7, %18 : vector<16x256xf32>
    %cst_15 = arith.constant dense<0.000000e+00> : vector<256xf32>
    %20 = vector.multi_reduction <add>, %19, %cst_15 [0] : vector<16x256xf32> to vector<256xf32>
    %21 = vector.shape_cast %20 : vector<256xf32> to vector<1x256xf32>
    %cst_16 = arith.constant 9.99999997E-7 : f32
    %22 = vector.broadcast %cst_16 : f32 to vector<1x256xf32>
    %23 = arith.addf %16, %22 : vector<1x256xf32>
    %24 = arith.divf %12, %23 : vector<1x256xf32>
    %cst_17 = arith.constant 6.28318548 : f32
    %25 = vector.broadcast %cst_17 : f32 to vector<1x256xf32>
    %26 = arith.mulf %24, %25 : vector<1x256xf32>
    %cst_18 = arith.constant 9.99999997E-7 : f32
    %27 = vector.broadcast %cst_18 : f32 to vector<1x256xf32>
    %28 = arith.addf %21, %27 : vector<1x256xf32>
    %29 = arith.divf %15, %28 : vector<1x256xf32>
    %cst_19 = arith.constant 6.28318548 : f32
    %30 = vector.broadcast %cst_19 : f32 to vector<1x256xf32>
    %31 = arith.mulf %29, %30 : vector<1x256xf32>
    %c0_20 = arith.constant 0 : index
    %c0_21 = arith.constant 0 : index
    %32 = vector.load %arg6[%c0_20, %c0_21] : memref<16x1xf32, #tpu.memory_space<vmem>>, vector<16x1xf32>
    %c0_22 = arith.constant 0 : index
    %c0_23 = arith.constant 0 : index
    %33 = vector.load %arg7[%c0_22, %c0_23] : memref<16x1xf32, #tpu.memory_space<vmem>>, vector<16x1xf32>
    %34 = vector.broadcast %26 : vector<1x256xf32> to vector<16x256xf32>
    %35 = vector.broadcast %32 : vector<16x1xf32> to vector<16x256xf32>
    %36 = arith.mulf %34, %35 : vector<16x256xf32>
    %37 = vector.broadcast %33 : vector<16x1xf32> to vector<16x256xf32>
    %38 = arith.addf %36, %37 : vector<16x256xf32>
    %39 = math.sin %38 : vector<16x256xf32>
    %c0_24 = arith.constant 0 : index
    %c0_25 = arith.constant 0 : index
    %c0_26 = arith.constant 0 : index
    %40 = vector.load %arg8[%c0_24, %c0_25, %c0_26] : memref<1x32x256xf32, #tpu.memory_space<vmem>>, vector<1x16x256xf32>
    %41 = vector.shape_cast %40 : vector<1x16x256xf32> to vector<16x256xf32>
    %42 = vector.shape_cast %39 : vector<16x256xf32> to vector<1x16x256xf32>
    tpu.vector_store %arg8[%c0_24, %c0_25, %c0_26], %42 {strides = array<i32>} : memref<1x32x256xf32, #tpu.memory_space<vmem>>, vector<1x16x256xf32>,
    %43 = vector.broadcast %31 : vector<1x256xf32> to vector<16x256xf32>
    %44 = vector.broadcast %32 : vector<16x1xf32> to vector<16x256xf32>
    %45 = arith.mulf %43, %44 : vector<16x256xf32>
    %46 = vector.broadcast %33 : vector<16x1xf32> to vector<16x256xf32>
    %47 = arith.addf %45, %46 : vector<16x256xf32>
    %48 = math.sin %47 : vector<16x256xf32>
    %c0_27 = arith.constant 0 : index
    %c16 = arith.constant 16 : index
    %c0_28 = arith.constant 0 : index
    %49 = vector.load %arg8[%c0_27, %c16, %c0_28] : memref<1x32x256xf32, #tpu.memory_space<vmem>>, vector<1x16x256xf32>
    %50 = vector.shape_cast %49 : vector<1x16x256xf32> to vector<16x256xf32>
    %51 = vector.shape_cast %48 : vector<16x256xf32> to vector<1x16x256xf32>
    tpu.vector_store %arg8[%c0_27, %c16, %c0_28], %51 {strides = array<i32>} : memref<1x32x256xf32, #tpu.memory_space<vmem>>, vector<1x16x256xf32>,
    return
  }
  func.func @transform_0(%arg0: i32) -> (i32, i32, i32) {
    %c0_i32 = arith.constant 0 : i32
    %c0_i32_0 = arith.constant 0 : i32
    %c0_i32_1 = arith.constant 0 : i32
    return %arg0, %c0_i32, %c0_i32_0 : i32, i32, i32
  }
  func.func @transform_1(%arg0: i32) -> (i32, i32) {
    %c0_i32 = arith.constant 0 : i32
    %c0_i32_0 = arith.constant 0 : i32
    %c0_i32_1 = arith.constant 0 : i32
    return %c0_i32, %c0_i32_0 : i32, i32
  }
  func.func @transform_2(%arg0: i32) -> (i32, i32) {
    %c0_i32 = arith.constant 0 : i32
    %c0_i32_0 = arith.constant 0 : i32
    %c0_i32_1 = arith.constant 0 : i32
    return %c0_i32, %c0_i32_0 : i32, i32
  }
  func.func @transform_3(%arg0: i32) -> (i32, i32) {
    %c0_i32 = arith.constant 0 : i32
    %c0_i32_0 = arith.constant 0 : i32
    %c0_i32_1 = arith.constant 0 : i32
    return %c0_i32, %c0_i32_0 : i32, i32
  }
  func.func @transform_4(%arg0: i32) -> (i32, i32) {
    %c0_i32 = arith.constant 0 : i32
    %c0_i32_0 = arith.constant 0 : i32
    %c0_i32_1 = arith.constant 0 : i32
    return %c0_i32, %c0_i32_0 : i32, i32
  }
  func.func @transform_5(%arg0: i32) -> (i32, i32) {
    %c0_i32 = arith.constant 0 : i32
    %c0_i32_0 = arith.constant 0 : i32
    %c0_i32_1 = arith.constant 0 : i32
    return %c0_i32, %c0_i32_0 : i32, i32
  }
  func.func @transform_6(%arg0: i32) -> (i32, i32) {
    %c0_i32 = arith.constant 0 : i32
    %c0_i32_0 = arith.constant 0 : i32
    %c0_i32_1 = arith.constant 0 : i32
    return %c0_i32, %c0_i32_0 : i32, i32
  }
  func.func @transform_7(%arg0: i32) -> (i32, i32, i32) {
    %c0_i32 = arith.constant 0 : i32
    %c0_i32_0 = arith.constant 0 : i32
    %c0_i32_1 = arith.constant 0 : i32
    return %arg0, %c0_i32, %c0_i32_0 : i32, i32, i32
  }
}

</mosaic_0001>

<llo_original>
// kernel: tpu_custom_call.1
$region0: #{tpu_custom_call.1}
  #allocation0 [shape = 'u32[]', space=smem, size = 0x4, offset = 0x4, fixed_abs, tag = 'smem constant byte address 0x4 - core index']
  #allocation1 [shape = 'u32[144,128]{1,0:T(1,128)}', space=vmem, size = 0x12000, scoped, tag = 'internal scratch']
  %s0 = inlined_call_operand.vmem [shape: f32[2,16,16], index: 0, kind: input, shape index: {}]
  %s1 = inlined_call_operand.hbm [shape: f32[16,16], index: 1, kind: input, shape index: {}]
  %s2 = inlined_call_operand.hbm [shape: f32[16,16], index: 2, kind: input, shape index: {}]
  %s3 = inlined_call_operand.hbm [shape: f32[16,256], index: 3, kind: input, shape index: {}]
  %s4 = inlined_call_operand.hbm [shape: f32[16,256], index: 4, kind: input, shape index: {}]
  %s5 = inlined_call_operand.vmem [shape: f32[16,1], index: 5, kind: input, shape index: {}]
  %s6 = inlined_call_operand.vmem [shape: f32[16,1], index: 6, kind: input, shape index: {}]
  %s7 = inlined_call_operand.hbm [shape: f32[2,32,256], index: 7, kind: output, shape index: {}]
  %s8 = sld [smem:[#allocation0]]
  $region77: #{tpu_custom_call.1} parent=0
    _
  %s10 = ssub.s32 1, %s8
  %s11 = scalar_select 0, %s10, %s8
  $region1: #{tpu_custom_call.1} parent=0
    #allocation2 [shape = 'u8[8192]{0}', space=vmem, size = 0x2000, scoped, tag = 'input window, operand 1, single buffered']
    #allocation3 [shape = 's32[2]{0}', space=sflag, size = 0x8, scoped, tag = 'scoped memory for tpu_custom_call.1']
    #allocation4 [shape = 's32[2]{0}', space=sflag, size = 0x8, scoped, tag = 'scoped memory for tpu_custom_call.1']
    #allocation5 [shape = 'u8[8192]{0}', space=vmem, size = 0x2000, scoped, tag = 'input window, operand 2, single buffered']
    #allocation6 [shape = 's32[1]{0}', space=sflag, size = 0x4, scoped, tag = 'scoped memory for tpu_custom_call.1']
    #allocation7 [shape = 'u8[16384]{0}', space=vmem, size = 0x4000, scoped, tag = 'input window, operand 3, single buffered']
    #allocation8 [shape = 'u8[16384]{0}', space=vmem, size = 0x4000, scoped, tag = 'input window, operand 4, single buffered']
    #allocation9 [shape = 's32[1]{0}', space=sflag, size = 0x4, scoped, tag = 'scoped memory for tpu_custom_call.1']
    #allocation10 [shape = 'u8[65536]{0}', space=vmem, size = 0x10000, scoped, tag = 'output window, operand 0']
    %12 = vsyncpa [#allocation3], 0
    %13 = vsyncpa [#allocation6], 0
    %14 = vsyncpa [#allocation9], 0
    %15 = vsyncpa [#allocation4], 0
    %s16 = scalar_lea.sflag [#allocation4], 1
    %17 = vsyncpa %s16, 0
    loop: start=0, step=1, limit=4
    $region2: #{tpu_custom_call.1} parent=1 // loop_pre_header
      _
    $region3: #{tpu_custom_call.1} parent=1 // loop_header
      %s19 = sphi 0, %s23
      %p20 = scmp.ge.s32.totalorder %s19, 4
      %s29 = sphi 0, %s31
      %s32 = sphi 0, %s29
      %s33 = sphi 0, %s32
      %s49 = sphi 0, %s33
      %s53 = sphi 0, %s53
      %s55 = sphi 0, %s53
      %s56 = sphi 0, %s55
      %s70 = sphi 0, %s56
      %s74 = sphi 0, %s74
      %s76 = sphi 0, %s74
      %s77 = sphi 0, %s76
      %s91 = sphi 0, %s77
      %s95 = sphi 0, %s95
      %s97 = sphi 0, %s95
      %s98 = sphi 0, %s97
      %s112 = sphi 0, %s98
      %s116 = sphi 0, %s116
      %s118 = sphi 0, %s116
      %s119 = sphi 0, %s118
      %s133 = sphi 0, %s119
      %s137 = sphi 0, %s137
      %s139 = sphi 0, %s137
      %s140 = sphi 0, %s139
      %s154 = sphi 0, %s140
      %s158 = sphi 0, %s158
      %s160 = sphi 0, %s158
      %s161 = sphi 0, %s160
      %s175 = sphi 0, %s161
      %s181 = sphi 0, %s183
      %s184 = sphi 0, %s181
      %s185 = sphi 0, %s184
      %s201 = sphi 0, %s185
    $region4: #{tpu_custom_call.1} parent=1 // loop_header_branch
      %22 = sbr.rel (%p20) target = $region8
    $region5: #{tpu_custom_call.1} parent=1 // loop_body
      %s24 = ssub.s32 %s19, 1
      %s25 = ssub.s32 %s19, 2
      %s26 = sadd.s32 %s19, 1
      %s27 = ssub.s32 %s19, %s26
      %p28 = scmp.eq.s32.totalorder %s27, 0
      %s30 = sadd.s32 %s29, 1
      %s31 = scalar_select %p28, %s29, %s30
      %p34 = pneg %p28
      %p35 = scmp.eq.s32.totalorder %s19, 1
      %p36 = por %p34, %p35
      %p37 = scmp.ne.s32.totalorder %s29, %s32
      %p38 = scmp.eq.s32.totalorder %s19, 0
      %p39 = por %p37, %p38
      %p40 = scmp.ne.s32.totalorder %s29, %s32
      %p41 = scmp.eq.s32.totalorder %s24, 1
      %p42 = por %p40, %p41
      %p43 = scmp.ne.s32.totalorder %s32, %s33
      %p44 = scmp.eq.s32.totalorder %s24, 0
      %p45 = por %p43, %p44
      %p46 = scmp.ne.s32.totalorder %s32, %s33
      %p47 = scmp.eq.s32.totalorder %s25, 1
      %p48 = por %p46, %p47
      %p50 = scmp.ne.s32.totalorder %s33, %s49
      %p51 = scmp.eq.s32.totalorder %s25, 0
      %p52 = por %p50, %p51
      %s54 = sadd.s32 %s53, 1
      %p57 = scmp.eq.s32.totalorder %s19, 1
      %p58 = scmp.ne.s32.totalorder %s53, %s55
      %p59 = scmp.eq.s32.totalorder %s19, 0
      %p60 = por %p58, %p59
      %p61 = scmp.ne.s32.totalorder %s53, %s55
      %p62 = scmp.eq.s32.totalorder %s24, 1
      %p63 = por %p61, %p62
      %p64 = scmp.ne.s32.totalorder %s55, %s56
      %p65 = scmp.eq.s32.totalorder %s24, 0
      %p66 = por %p64, %p65
      %p67 = scmp.ne.s32.totalorder %s55, %s56
      %p68 = scmp.eq.s32.totalorder %s25, 1
      %p69 = por %p67, %p68
      %p71 = scmp.ne.s32.totalorder %s56, %s70
      %p72 = scmp.eq.s32.totalorder %s25, 0
      %p73 = por %p71, %p72
      %s75 = sadd.s32 %s74, 1
      %p78 = scmp.eq.s32.totalorder %s19, 1
      %p79 = scmp.ne.s32.totalorder %s74, %s76
      %p80 = scmp.eq.s32.totalorder %s19, 0
      %p81 = por %p79, %p80
      %p82 = scmp.ne.s32.totalorder %s74, %s76
      %p83 = scmp.eq.s32.totalorder %s24, 1
      %p84 = por %p82, %p83
      %p85 = scmp.ne.s32.totalorder %s76, %s77
      %p86 = scmp.eq.s32.totalorder %s24, 0
      %p87 = por %p85, %p86
      %p88 = scmp.ne.s32.totalorder %s76, %s77
      %p89 = scmp.eq.s32.totalorder %s25, 1
      %p90 = por %p88, %p89
      %p92 = scmp.ne.s32.totalorder %s77, %s91
      %p93 = scmp.eq.s32.totalorder %s25, 0
      %p94 = por %p92, %p93
      %s96 = sadd.s32 %s95, 1
      %p99 = scmp.eq.s32.totalorder %s19, 1
      %p100 = scmp.ne.s32.totalorder %s95, %s97
      %p101 = scmp.eq.s32.totalorder %s19, 0
      %p102 = por %p100, %p101
      %p103 = scmp.ne.s32.totalorder %s95, %s97
      %p104 = scmp.eq.s32.totalorder %s24, 1
      %p105 = por %p103, %p104
      %p106 = scmp.ne.s32.totalorder %s97, %s98
      %p107 = scmp.eq.s32.totalorder %s24, 0
      %p108 = por %p106, %p107
      %p109 = scmp.ne.s32.totalorder %s97, %s98
      %p110 = scmp.eq.s32.totalorder %s25, 1
      %p111 = por %p109, %p110
      %p113 = scmp.ne.s32.totalorder %s98, %s112
      %p114 = scmp.eq.s32.totalorder %s25, 0
      %p115 = por %p113, %p114
      %s117 = sadd.s32 %s116, 1
      %p120 = scmp.eq.s32.totalorder %s19, 1
      %p121 = scmp.ne.s32.totalorder %s116, %s118
      %p122 = scmp.eq.s32.totalorder %s19, 0
      %p123 = por %p121, %p122
      %p124 = scmp.ne.s32.totalorder %s116, %s118
      %p125 = scmp.eq.s32.totalorder %s24, 1
      %p126 = por %p124, %p125
      %p127 = scmp.ne.s32.totalorder %s118, %s119
      %p128 = scmp.eq.s32.totalorder %s24, 0
      %p129 = por %p127, %p128
      %p130 = scmp.ne.s32.totalorder %s118, %s119
      %p131 = scmp.eq.s32.totalorder %s25, 1
      %p132 = por %p130, %p131
      %p134 = scmp.ne.s32.totalorder %s119, %s133
      %p135 = scmp.eq.s32.totalorder %s25, 0
      %p136 = por %p134, %p135
      %s138 = sadd.s32 %s137, 1
      %p141 = scmp.eq.s32.totalorder %s19, 1
      %p142 = scmp.ne.s32.totalorder %s137, %s139
      %p143 = scmp.eq.s32.totalorder %s19, 0
      %p144 = por %p142, %p143
      %p145 = scmp.ne.s32.totalorder %s137, %s139
      %p146 = scmp.eq.s32.totalorder %s24, 1
      %p147 = por %p145, %p146
      %p148 = scmp.ne.s32.totalorder %s139, %s140
      %p149 = scmp.eq.s32.totalorder %s24, 0
      %p150 = por %p148, %p149
      %p151 = scmp.ne.s32.totalorder %s139, %s140
      %p152 = scmp.eq.s32.totalorder %s25, 1
      %p153 = por %p151, %p152
      %p155 = scmp.ne.s32.totalorder %s140, %s154
      %p156 = scmp.eq.s32.totalorder %s25, 0
      %p157 = por %p155, %p156
      %s159 = sadd.s32 %s158, 1
      %p162 = scmp.eq.s32.totalorder %s19, 1
      %p163 = scmp.ne.s32.totalorder %s158, %s160
      %p164 = scmp.eq.s32.totalorder %s19, 0
      %p165 = por %p163, %p164
      %p166 = scmp.ne.s32.totalorder %s158, %s160
      %p167 = scmp.eq.s32.totalorder %s24, 1
      %p168 = por %p166, %p167
      %p169 = scmp.ne.s32.totalorder %s160, %s161
      %p170 = scmp.eq.s32.totalorder %s24, 0
      %p171 = por %p169, %p170
      %p172 = scmp.ne.s32.totalorder %s160, %s161
      %p173 = scmp.eq.s32.totalorder %s25, 1
      %p174 = por %p172, %p173
      %p176 = scmp.ne.s32.totalorder %s161, %s175
      %p177 = scmp.eq.s32.totalorder %s25, 0
      %p178 = por %p176, %p177
      %s179 = ssub.s32 %s19, %s26
      %p180 = scmp.eq.s32.totalorder %s179, 0
      %s182 = sadd.s32 %s181, 1
      %s183 = scalar_select %p180, %s181, %s182
      %p186 = pneg %p180
      %p187 = scmp.eq.s32.totalorder %s19, 1
      %p188 = por %p186, %p187
      %p189 = scmp.ne.s32.totalorder %s181, %s184
      %p190 = scmp.eq.s32.totalorder %s19, 0
      %p191 = por %p189, %p190
      %p192 = scmp.ne.s32.totalorder %s181, %s184
      %p193 = scmp.eq.s32.totalorder %s24, 1
      %p194 = por %p192, %p193
      %p195 = scmp.ne.s32.totalorder %s184, %s185
      %p196 = scmp.eq.s32.totalorder %s24, 0
      %p197 = por %p195, %p196
      %p198 = scmp.ne.s32.totalorder %s184, %s185
      %p199 = scmp.eq.s32.totalorder %s25, 1
      %p200 = por %p198, %p199
      %p202 = scmp.ne.s32.totalorder %s185, %s201
      %p203 = scmp.eq.s32.totalorder %s25, 0
      %p204 = por %p202, %p203
      %p205 = scmp.le.s32.totalorder 1, %s19
      %p206 = scmp.lt.s32.totalorder %s19, 3
      %p207 = pnand %p205, %p206
      %p208 = pneg %p207
      // Predicated region
      $region9: #{tpu_custom_call.1} parent=5 // pred_check
        _
      $region10: #{tpu_custom_call.1} parent=5 // pred_check_branch
        %210 = sbr.rel (%p207) target = $region12
      $region11: #{tpu_custom_call.1} parent=5 // pred_region
        %s211 = ssub.s32 %s19, 1
        // Predicated region
        $region13: #{tpu_custom_call.1} parent=11 // pred_check
          %p212 = pneg %p66
        $region14: #{tpu_custom_call.1} parent=11 // pred_check_branch
          %214 = sbr.rel (%p212) target = $region16
        $region15: #{tpu_custom_call.1} parent=11 // pred_region
          %s216 = ssub.s32 256, 256
          %217 = vsyncadd [#allocation3], %s216
          %s218 = sshll.u32 [#allocation2], 4
          %s219 = int_to_ptr.vmem [resolvable:$true] %s218
          %224 = dma.hbm_to_vmem [thread:$0]  %s1, 256, %s219, [#allocation3], 128, 128, 8
        $region16: #{tpu_custom_call.1} parent=11 // pred_fallthru
          _
        // Predicated region
        $region17: #{tpu_custom_call.1} parent=11 // pred_check
          %p225 = pneg %p87
        $region18: #{tpu_custom_call.1} parent=11 // pred_check_branch
          %227 = sbr.rel (%p225) target = $region20
        $region19: #{tpu_custom_call.1} parent=11 // pred_region
          %s229 = ssub.s32 256, 256
          %230 = vsyncadd [#allocation6], %s229
          %s231 = sshll.u32 [#allocation5], 4
          %s232 = int_to_ptr.vmem [resolvable:$true] %s231
          %237 = dma.hbm_to_vmem [thread:$0]  %s2, 256, %s232, [#allocation6], 128, 128, 8
        $region20: #{tpu_custom_call.1} parent=11 // pred_fallthru
          _
        // Predicated region
        $region21: #{tpu_custom_call.1} parent=11 // pred_check
          %p238 = pneg %p108
        $region22: #{tpu_custom_call.1} parent=11 // pred_check_branch
          %240 = sbr.rel (%p238) target = $region24
        $region23: #{tpu_custom_call.1} parent=11 // pred_region
          %s242 = ssub.s32 512, 512
          %243 = vsyncadd [#allocation6], %s242
          %s244 = sshll.u32 [#allocation7], 4
          %s245 = int_to_ptr.vmem [resolvable:$true] %s244
          %250 = dma.hbm_to_vmem [thread:$0]  %s3, 512, %s245, [#allocation6], 256, 256, 16
        $region24: #{tpu_custom_call.1} parent=11 // pred_fallthru
          _
        // Predicated region
        $region25: #{tpu_custom_call.1} parent=11 // pred_check
          %p251 = pneg %p129
        $region26: #{tpu_custom_call.1} parent=11 // pred_check_branch
          %253 = sbr.rel (%p251) target = $region28
        $region27: #{tpu_custom_call.1} parent=11 // pred_region
          %s255 = ssub.s32 512, 512
          %256 = vsyncadd [#allocation9], %s255
          %s257 = sshll.u32 [#allocation8], 4
          %s258 = int_to_ptr.vmem [resolvable:$true] %s257
          %263 = dma.hbm_to_vmem [thread:$0]  %s4, 512, %s258, [#allocation9], 256, 256, 16
        $region28: #{tpu_custom_call.1} parent=11 // pred_fallthru
          _
        // Predicated region
        $region29: #{tpu_custom_call.1} parent=11 // pred_check
          %p264 = pneg %p150
        $region30: #{tpu_custom_call.1} parent=11 // pred_check_branch
          %266 = sbr.rel (%p264) target = $region32
        $region31: #{tpu_custom_call.1} parent=11 // pred_region
          _
        $region32: #{tpu_custom_call.1} parent=11 // pred_fallthru
          _
        // Predicated region
        $region33: #{tpu_custom_call.1} parent=11 // pred_check
          %p267 = pneg %p171
        $region34: #{tpu_custom_call.1} parent=11 // pred_check_branch
          %269 = sbr.rel (%p267) target = $region36
        $region35: #{tpu_custom_call.1} parent=11 // pred_region
          _
        $region36: #{tpu_custom_call.1} parent=11 // pred_fallthru
          _
      $region12: #{tpu_custom_call.1} parent=5 // pred_fallthru
        _
      %p270 = scmp.lt.s32.totalorder %s19, 2
      // Predicated region
      $region37: #{tpu_custom_call.1} parent=5 // pred_check
        %p271 = pneg %p270
      $region38: #{tpu_custom_call.1} parent=5 // pred_check_branch
        %273 = sbr.rel (%p271) target = $region40
      $region39: #{tpu_custom_call.1} parent=5 // pred_region
        // Predicated region
        $region41: #{tpu_custom_call.1} parent=39 // pred_check
          %p274 = pneg %p39
        $region42: #{tpu_custom_call.1} parent=39 // pred_check_branch
          %276 = sbr.rel (%p274) target = $region44
        $region43: #{tpu_custom_call.1} parent=39 // pred_region
          %p277 = scmp.lt.s32.totalorder %s19, 1
          %s278 = scalar_select %p277, %s19, 1
          %s279 = smul.addr %s278, 2
          %s280 = smul.addr %s279, 8
          %s281 = scalar_lea.vmem %s0, %s280
        $region44: #{tpu_custom_call.1} parent=39 // pred_fallthru
          _
      $region40: #{tpu_custom_call.1} parent=5 // pred_fallthru
        _
      %p282 = scmp.le.s32.totalorder 1, %s19
      %p283 = scmp.lt.s32.totalorder %s19, 3
      %p284 = pnand %p282, %p283
      %p285 = pneg %p284
      // Predicated region
      $region45: #{tpu_custom_call.1} parent=5 // pred_check
        _
      $region46: #{tpu_custom_call.1} parent=5 // pred_check_branch
        %287 = sbr.rel (%p284) target = $region48
      $region47: #{tpu_custom_call.1} parent=5 // pred_region
        %s288 = ssub.s32 %s19, 1
        // Predicated region
        $region49: #{tpu_custom_call.1} parent=47 // pred_check
          %p289 = pneg %p66
        $region50: #{tpu_custom_call.1} parent=47 // pred_check_branch
          %291 = sbr.rel (%p289) target = $region52
        $region51: #{tpu_custom_call.1} parent=47 // pred_region
          %292 = dma.done [#allocation3], 256
        $region52: #{tpu_custom_call.1} parent=47 // pred_fallthru
          _
        // Predicated region
        $region53: #{tpu_custom_call.1} parent=47 // pred_check
          %p293 = pneg %p87
        $region54: #{tpu_custom_call.1} parent=47 // pred_check_branch
          %295 = sbr.rel (%p293) target = $region56
        $region55: #{tpu_custom_call.1} parent=47 // pred_region
          %296 = dma.done [#allocation6], 256
        $region56: #{tpu_custom_call.1} parent=47 // pred_fallthru
          _
        // Predicated region
        $region57: #{tpu_custom_call.1} parent=47 // pred_check
          %p297 = pneg %p108
        $region58: #{tpu_custom_call.1} parent=47 // pred_check_branch
          %299 = sbr.rel (%p297) target = $region60
        $region59: #{tpu_custom_call.1} parent=47 // pred_region
          %300 = dma.done [#allocation6], 512
        $region60: #{tpu_custom_call.1} parent=47 // pred_fallthru
          _
        // Predicated region
        $region61: #{tpu_custom_call.1} parent=47 // pred_check
          %p301 = pneg %p129
        $region62: #{tpu_custom_call.1} parent=47 // pred_check_branch
          %303 = sbr.rel (%p301) target = $region64
        $region63: #{tpu_custom_call.1} parent=47 // pred_region
          %304 = dma.done [#allocation9], 512
        $region64: #{tpu_custom_call.1} parent=47 // pred_fallthru
          _
        %p305 = scmp.lt.s32.totalorder %s24, 1
        %s306 = scalar_select %p305, %s24, 1
        %s307 = smul.addr %s306, 2
        %s308 = smul.addr %s307, 8
        %s309 = scalar_lea.vmem %s0, %s308
        %p310 = pneg %p45
        %p311 = pneg %p42
        %p312 = pneg %p66
        %p313 = pneg %p63
        %p314 = pneg %p87
        %p315 = pneg %p84
        %p316 = pneg %p108
        %p317 = pneg %p105
        %p318 = pneg %p129
        %p319 = pneg %p126
        %p320 = pneg %p150
        %p321 = pneg %p147
        %p322 = pneg %p171
        %p323 = pneg %p168
        %p324 = pneg %p197
        %p325 = pneg %p194
        %s326 = sand.u32 %s184, 1
        %s327 = scalar_lea.sflag [#allocation4], %s326
        %s328 = sand.u32 %s184, 1
        %s329 = smul.addr %s328, 64
        %s330 = scalar_lea.vmem [#allocation10], %s329
        %p331 = scmp.lt.s32.totalorder %s24, 1
        %s332 = scalar_select %p331, %s24, 1
        %s333 = smul.addr %s332, 2
        %s334 = smul.addr %s333, 8
        %s335 = scalar_lea.vmem %s0, %s334
        %v336 = vld [vmem:[%s335] sm:$0xff]
        %v337 = vld [vmem:[%s335 + $0x8] sm:$0xff]
        %v338 = vld [vmem:[#allocation2] sm:$0xff]
        %v339 = vld [vmem:[#allocation2 + $0x8] sm:$0xff]
        %vm340 = vcmask 130048
        %v342 = vsel %vm340, %v338, 0
        %v345 = vsel %vm340, %v339, 0
        %347 = vmatprep.subr.mxu0 0.0
        %348 = vmatpush1.msra.mxu0 %v336
        %349 = vmatprep.subr.mxu0 0.0
        %350 = vmatpush1.msra.mxu0 %v337
        %351 = vmatprep.subr.mxu0 0.0
        %352 = vmatpush1.msra.mxu0 0.0
        %353 = vmatprep.subr.mxu0 0.0
        %354 = vmatpush1.msra.mxu0 0.0
        %355 = vmatprep.subr.mxu0 0.0
        %356 = vmatpush1.msra.mxu0 0.0
        %357 = vmatprep.subr.mxu0 0.0
        %358 = vmatpush1.msra.mxu0 0.0
        %359 = vmatprep.subr.mxu0 0.0
        %360 = vmatpush1.msra.mxu0 0.0
        %361 = vmatprep.subr.mxu0 0.0
        %362 = vmatpush1.msra.mxu0 0.0
        %363 = vmatprep.subr.mxu0 0.0
        %364 = vmatpush1.msra.mxu0 0.0
        %365 = vmatprep.subr.mxu0 0.0
        %366 = vmatpush1.msra.mxu0 0.0
        %367 = vmatprep.subr.mxu0 0.0
        %368 = vmatpush1.msra.mxu0 0.0
        %369 = vmatprep.subr.mxu0 0.0
        %370 = vmatpush1.msra.mxu0 0.0
        %371 = vmatprep.subr.mxu0 0.0
        %372 = vmatpush1.msra.mxu0 0.0
        %373 = vmatprep.subr.mxu0 0.0
        %374 = vmatpush1.msra.mxu0 0.0
        %375 = vmatprep.subr.mxu0 0.0
        %376 = vmatpush1.msra.mxu0 0.0
        %377 = vmatprep.subr.mxu0 0.0
        %378 = vmatpush1.msra.mxu0 0.0
        %379 = vmatprep.subr.mxu0 0.0
        %380 = vmatpush1.msra.mxu0 0.0
        %381 = vmatprep.subr.mxu0 0.0
        %382 = vmatpush1.msra.mxu0 0.0
        %383 = vmatprep.subr.mxu0 0.0
        %384 = vmatpush1.msra.mxu0 0.0
        %385 = vmatprep.subr.mxu0 0.0
        %386 = vmatpush1.msra.mxu0 0.0
        %387 = vmatprep.subr.mxu0 0.0
        %388 = vmatpush1.msra.mxu0 0.0
        %389 = vmatprep.subr.mxu0 0.0
        %390 = vmatpush1.msra.mxu0 0.0
        %391 = vmatprep.subr.mxu0 0.0
        %392 = vmatpush1.msra.mxu0 0.0
        %393 = vmatprep.subr.mxu0 0.0
        %394 = vmatpush1.msra.mxu0 0.0
        %395 = vmatprep.subr.mxu0 0.0
        %396 = vmatpush1.msra.mxu0 0.0
        %397 = vmatprep.subr.mxu0 0.0
        %398 = vmatpush1.msra.mxu0 0.0
        %399 = vmatprep.subr.mxu0 0.0
        %400 = vmatpush1.msra.mxu0 0.0
        %401 = vmatprep.subr.mxu0 0.0
        %402 = vmatpush1.msra.mxu0 0.0
        %403 = vmatprep.subr.mxu0 0.0
        %404 = vmatpush1.msra.mxu0 0.0
        %405 = vmatprep.subr.mxu0 0.0
        %406 = vmatpush1.msra.mxu0 0.0
        %407 = vmatprep.subr.mxu0 0.0
        %408 = vmatpush1.msra.mxu0 0.0
        %409 = vmatprep.subr.mxu0 0.0
        %410 = vmatpush1.msra.mxu0 0.0
        %411 = vmatprep.mubr.f32.mxu0 0.0
        %412 = vmatmul.mubr.f32.gmra.mrb[0].mxu0 %v342
        %v413 = vpop.f32.mrb[0].mxu0
        %v414 = vadd.f32 0.0, %v413
        %v415 = vpop.f32.mrb[0].mxu0
        %416 = vmatprep.mubr.f32.mxu0 0.0
        %417 = vmatmul.mubr.f32.gmra.mrb[0].mxu0 %v345
        %v418 = vpop.f32.mrb[0].mxu0
        %v419 = vadd.f32 0.0, %v418
        %v420 = vpop.f32.mrb[0].mxu0
        %421 = vdwg.mxu0
        %v422 = vld [vmem:[#allocation5] sm:$0xff]
        %v423 = vld [vmem:[#allocation5 + $0x8] sm:$0xff]
        %v425 = vsel %vm340, %v336, 0
        %v428 = vsel %vm340, %v337, 0
        %430 = vmatprep.subr.mxu0 0.0
        %431 = vmatpush1.msra.mxu0 %v422
        %432 = vmatprep.subr.mxu0 0.0
        %433 = vmatpush1.msra.mxu0 %v423
        %434 = vmatprep.subr.mxu0 0.0
        %435 = vmatpush1.msra.mxu0 0.0
        %436 = vmatprep.subr.mxu0 0.0
        %437 = vmatpush1.msra.mxu0 0.0
        %438 = vmatprep.subr.mxu0 0.0
        %439 = vmatpush1.msra.mxu0 0.0
        %440 = vmatprep.subr.mxu0 0.0
        %441 = vmatpush1.msra.mxu0 0.0
        %442 = vmatprep.subr.mxu0 0.0
        %443 = vmatpush1.msra.mxu0 0.0
        %444 = vmatprep.subr.mxu0 0.0
        %445 = vmatpush1.msra.mxu0 0.0
        %446 = vmatprep.subr.mxu0 0.0
        %447 = vmatpush1.msra.mxu0 0.0
        %448 = vmatprep.subr.mxu0 0.0
        %449 = vmatpush1.msra.mxu0 0.0
        %450 = vmatprep.subr.mxu0 0.0
        %451 = vmatpush1.msra.mxu0 0.0
        %452 = vmatprep.subr.mxu0 0.0
        %453 = vmatpush1.msra.mxu0 0.0
        %454 = vmatprep.subr.mxu0 0.0
        %455 = vmatpush1.msra.mxu0 0.0
        %456 = vmatprep.subr.mxu0 0.0
        %457 = vmatpush1.msra.mxu0 0.0
        %458 = vmatprep.subr.mxu0 0.0
        %459 = vmatpush1.msra.mxu0 0.0
        %460 = vmatprep.subr.mxu0 0.0
        %461 = vmatpush1.msra.mxu0 0.0
        %462 = vmatprep.subr.mxu0 0.0
        %463 = vmatpush1.msra.mxu0 0.0
        %464 = vmatprep.subr.mxu0 0.0
        %465 = vmatpush1.msra.mxu0 0.0
        %466 = vmatprep.subr.mxu0 0.0
        %467 = vmatpush1.msra.mxu0 0.0
        %468 = vmatprep.subr.mxu0 0.0
        %469 = vmatpush1.msra.mxu0 0.0
        %470 = vmatprep.subr.mxu0 0.0
        %471 = vmatpush1.msra.mxu0 0.0
        %472 = vmatprep.subr.mxu0 0.0
        %473 = vmatpush1.msra.mxu0 0.0
        %474 = vmatprep.subr.mxu0 0.0
        %475 = vmatpush1.msra.mxu0 0.0
        %476 = vmatprep.subr.mxu0 0.0
        %477 = vmatpush1.msra.mxu0 0.0
        %478 = vmatprep.subr.mxu0 0.0
        %479 = vmatpush1.msra.mxu0 0.0
        %480 = vmatprep.subr.mxu0 0.0
        %481 = vmatpush1.msra.mxu0 0.0
        %482 = vmatprep.subr.mxu0 0.0
        %483 = vmatpush1.msra.mxu0 0.0
        %484 = vmatprep.subr.mxu0 0.0
        %485 = vmatpush1.msra.mxu0 0.0
        %486 = vmatprep.subr.mxu0 0.0
        %487 = vmatpush1.msra.mxu0 0.0
        %488 = vmatprep.subr.mxu0 0.0
        %489 = vmatpush1.msra.mxu0 0.0
        %490 = vmatprep.subr.mxu0 0.0
        %491 = vmatpush1.msra.mxu0 0.0
        %492 = vmatprep.subr.mxu0 0.0
        %493 = vmatpush1.msra.mxu0 0.0
        %494 = vmatprep.mubr.f32.mxu0 0.0
        %495 = vmatmul.mubr.f32.gmra.mrb[0].mxu0 %v425
        %v496 = vpop.f32.mrb[0].mxu0
        %v497 = vadd.f32 0.0, %v496
        %v498 = vpop.f32.mrb[0].mxu0
        %499 = vmatprep.mubr.f32.mxu0 0.0
        %500 = vmatmul.mubr.f32.gmra.mrb[0].mxu0 %v428
        %v501 = vpop.f32.mrb[0].mxu0
        %v502 = vadd.f32 0.0, %v501
        %v503 = vpop.f32.mrb[0].mxu0
        %504 = vdwg.mxu0
        %v505 = vld [vmem:[#allocation7] sm:$0xff]
        %v506 = vld [vmem:[#allocation7 + $0x8] sm:$0xff]
        %v507 = vld [vmem:[#allocation7 + $0x10] sm:$0xff]
        %v508 = vld [vmem:[#allocation7 + $0x18] sm:$0xff]
        %v509 = vld [vmem:[#allocation8] sm:$0xff]
        %v510 = vld [vmem:[#allocation8 + $0x8] sm:$0xff]
        %v511 = vld [vmem:[#allocation8 + $0x10] sm:$0xff]
        %v512 = vld [vmem:[#allocation8 + $0x18] sm:$0xff]
        %v514 = vsel %vm340, %v414, 0
        %v517 = vsel %vm340, %v419, 0
        %519 = vmatprep.subr.mxu0 %v506
        %520 = vmatpush1.msra.mxu0 %v505
        %521 = vmatprep.subr.mxu0 %v508
        %522 = vmatpush1.msra.mxu0 %v507
        %523 = vmatprep.subr.mxu0 0.0
        %524 = vmatpush1.msra.mxu0 0.0
        %525 = vmatprep.subr.mxu0 0.0
        %526 = vmatpush1.msra.mxu0 0.0
        %527 = vmatprep.subr.mxu0 0.0
        %528 = vmatpush1.msra.mxu0 0.0
        %529 = vmatprep.subr.mxu0 0.0
        %530 = vmatpush1.msra.mxu0 0.0
        %531 = vmatprep.subr.mxu0 0.0
        %532 = vmatpush1.msra.mxu0 0.0
        %533 = vmatprep.subr.mxu0 0.0
        %534 = vmatpush1.msra.mxu0 0.0
        %535 = vmatprep.subr.mxu0 0.0
        %536 = vmatpush1.msra.mxu0 0.0
        %537 = vmatprep.subr.mxu0 0.0
        %538 = vmatpush1.msra.mxu0 0.0
        %539 = vmatprep.subr.mxu0 0.0
        %540 = vmatpush1.msra.mxu0 0.0
        %541 = vmatprep.subr.mxu0 0.0
        %542 = vmatpush1.msra.mxu0 0.0
        %543 = vmatprep.subr.mxu0 0.0
        %544 = vmatpush1.msra.mxu0 0.0
        %545 = vmatprep.subr.mxu0 0.0
        %546 = vmatpush1.msra.mxu0 0.0
        %547 = vmatprep.subr.mxu0 0.0
        %548 = vmatpush1.msra.mxu0 0.0
        %549 = vmatprep.subr.mxu0 0.0
        %550 = vmatpush1.msra.mxu0 0.0
        %551 = vmatprep.subr.mxu0 0.0
        %552 = vmatpush1.msra.mxu0 0.0
        %553 = vmatprep.subr.mxu0 0.0
        %554 = vmatpush1.msra.mxu0 0.0
        %555 = vmatprep.subr.mxu0 0.0
        %556 = vmatpush1.msra.mxu0 0.0
        %557 = vmatprep.subr.mxu0 0.0
        %558 = vmatpush1.msra.mxu0 0.0
        %559 = vmatprep.subr.mxu0 0.0
        %560 = vmatpush1.msra.mxu0 0.0
        %561 = vmatprep.subr.mxu0 0.0
        %562 = vmatpush1.msra.mxu0 0.0
        %563 = vmatprep.subr.mxu0 0.0
        %564 = vmatpush1.msra.mxu0 0.0
        %565 = vmatprep.subr.mxu0 0.0
        %566 = vmatpush1.msra.mxu0 0.0
        %567 = vmatprep.subr.mxu0 0.0
        %568 = vmatpush1.msra.mxu0 0.0
        %569 = vmatprep.subr.mxu0 0.0
        %570 = vmatpush1.msra.mxu0 0.0
        %571 = vmatprep.subr.mxu0 0.0
        %572 = vmatpush1.msra.mxu0 0.0
        %573 = vmatprep.subr.mxu0 0.0
        %574 = vmatpush1.msra.mxu0 0.0
        %575 = vmatprep.subr.mxu0 0.0
        %576 = vmatpush1.msra.mxu0 0.0
        %577 = vmatprep.subr.mxu0 0.0
        %578 = vmatpush1.msra.mxu0 0.0
        %579 = vmatprep.subr.mxu0 0.0
        %580 = vmatpush1.msra.mxu0 0.0
        %581 = vmatprep.subr.mxu0 0.0
        %582 = vmatpush1.msra.mxu0 0.0
        %583 = vmatprep.mubr.f32.mxu0 0.0
        %584 = vmatmul.mubr.f32.gmra.mrb[0].mxu0 %v514
        %v585 = vpop.f32.mrb[0].mxu0
        %v586 = vadd.f32 0.0, %v585
        %v587 = vpop.f32.mrb[0].mxu0
        %v588 = vadd.f32 0.0, %v587
        %589 = vmatprep.mubr.f32.mxu0 0.0
        %590 = vmatmul.mubr.f32.gmra.mrb[0].mxu0 %v517
        %v591 = vpop.f32.mrb[0].mxu0
        %v592 = vadd.f32 0.0, %v591
        %v593 = vpop.f32.mrb[0].mxu0
        %v594 = vadd.f32 0.0, %v593
        %595 = vdwg.mxu0
        %v597 = vsel %vm340, %v497, 0
        %v600 = vsel %vm340, %v502, 0
        %602 = vmatprep.subr.mxu0 %v506
        %603 = vmatpush1.msra.mxu0 %v505
        %604 = vmatprep.subr.mxu0 %v508
        %605 = vmatpush1.msra.mxu0 %v507
        %606 = vmatprep.subr.mxu0 0.0
        %607 = vmatpush1.msra.mxu0 0.0
        %608 = vmatprep.subr.mxu0 0.0
        %609 = vmatpush1.msra.mxu0 0.0
        %610 = vmatprep.subr.mxu0 0.0
        %611 = vmatpush1.msra.mxu0 0.0
        %612 = vmatprep.subr.mxu0 0.0
        %613 = vmatpush1.msra.mxu0 0.0
        %614 = vmatprep.subr.mxu0 0.0
        %615 = vmatpush1.msra.mxu0 0.0
        %616 = vmatprep.subr.mxu0 0.0
        %617 = vmatpush1.msra.mxu0 0.0
        %618 = vmatprep.subr.mxu0 0.0
        %619 = vmatpush1.msra.mxu0 0.0
        %620 = vmatprep.subr.mxu0 0.0
        %621 = vmatpush1.msra.mxu0 0.0
        %622 = vmatprep.subr.mxu0 0.0
        %623 = vmatpush1.msra.mxu0 0.0
        %624 = vmatprep.subr.mxu0 0.0
        %625 = vmatpush1.msra.mxu0 0.0
        %626 = vmatprep.subr.mxu0 0.0
        %627 = vmatpush1.msra.mxu0 0.0
        %628 = vmatprep.subr.mxu0 0.0
        %629 = vmatpush1.msra.mxu0 0.0
        %630 = vmatprep.subr.mxu0 0.0
        %631 = vmatpush1.msra.mxu0 0.0
        %632 = vmatprep.subr.mxu0 0.0
        %633 = vmatpush1.msra.mxu0 0.0
        %634 = vmatprep.subr.mxu0 0.0
        %635 = vmatpush1.msra.mxu0 0.0
        %636 = vmatprep.subr.mxu0 0.0
        %637 = vmatpush1.msra.mxu0 0.0
        %638 = vmatprep.subr.mxu0 0.0
        %639 = vmatpush1.msra.mxu0 0.0
        %640 = vmatprep.subr.mxu0 0.0
        %641 = vmatpush1.msra.mxu0 0.0
        %642 = vmatprep.subr.mxu0 0.0
        %643 = vmatpush1.msra.mxu0 0.0
        %644 = vmatprep.subr.mxu0 0.0
        %645 = vmatpush1.msra.mxu0 0.0
        %646 = vmatprep.subr.mxu0 0.0
        %647 = vmatpush1.msra.mxu0 0.0
        %648 = vmatprep.subr.mxu0 0.0
        %649 = vmatpush1.msra.mxu0 0.0
        %650 = vmatprep.subr.mxu0 0.0
        %651 = vmatpush1.msra.mxu0 0.0
        %652 = vmatprep.subr.mxu0 0.0
        %653 = vmatpush1.msra.mxu0 0.0
        %654 = vmatprep.subr.mxu0 0.0
        %655 = vmatpush1.msra.mxu0 0.0
        %656 = vmatprep.subr.mxu0 0.0
        %657 = vmatpush1.msra.mxu0 0.0
        %658 = vmatprep.subr.mxu0 0.0
        %659 = vmatpush1.msra.mxu0 0.0
        %660 = vmatprep.subr.mxu0 0.0
        %661 = vmatpush1.msra.mxu0 0.0
        %662 = vmatprep.subr.mxu0 0.0
        %663 = vmatpush1.msra.mxu0 0.0
        %664 = vmatprep.subr.mxu0 0.0
        %665 = vmatpush1.msra.mxu0 0.0
        %666 = vmatprep.mubr.f32.mxu0 0.0
        %667 = vmatmul.mubr.f32.gmra.mrb[0].mxu0 %v597
        %v668 = vpop.f32.mrb[0].mxu0
        %v669 = vadd.f32 0.0, %v668
        %v670 = vpop.f32.mrb[0].mxu0
        %v671 = vadd.f32 0.0, %v670
        %672 = vmatprep.mubr.f32.mxu0 0.0
        %673 = vmatmul.mubr.f32.gmra.mrb[0].mxu0 %v600
        %v674 = vpop.f32.mrb[0].mxu0
        %v675 = vadd.f32 0.0, %v674
        %v676 = vpop.f32.mrb[0].mxu0
        %v677 = vadd.f32 0.0, %v676
        %678 = vdwg.mxu0
        %v679 = vmul.f32 %v509, %v586
        %v680 = vmul.f32 %v510, %v588
        %v681 = vmul.f32 %v511, %v592
        %v682 = vmul.f32 %v512, %v594
        %v683 = vadd.f32 %v679, %v681
        %v684 = vrot.slane %v683, 4
        %v685 = vadd.f32 %v683, %v684
        %v686 = vrot.slane %v685, 2
        %v687 = vadd.f32 %v685, %v686
        %v688 = vrot.slane %v687, 1
        %v689 = vadd.f32 %v687, %v688
        %v690 = vadd.f32 %v680, %v682
        %v691 = vrot.slane %v690, 4
        %v692 = vadd.f32 %v690, %v691
        %v693 = vrot.slane %v692, 2
        %v694 = vadd.f32 %v692, %v693
        %v695 = vrot.slane %v694, 1
        %v696 = vadd.f32 %v694, %v695
        %v697 = vmul.f32 %v509, %v669
        %v698 = vmul.f32 %v510, %v671
        %v699 = vmul.f32 %v511, %v675
        %v700 = vmul.f32 %v512, %v677
        %v701 = vadd.f32 %v697, %v699
        %v702 = vrot.slane %v701, 4
        %v703 = vadd.f32 %v701, %v702
        %v704 = vrot.slane %v703, 2
        %v705 = vadd.f32 %v703, %v704
        %v706 = vrot.slane %v705, 1
        %v707 = vadd.f32 %v705, %v706
        %v708 = vadd.f32 %v698, %v700
        %v709 = vrot.slane %v708, 4
        %v710 = vadd.f32 %v708, %v709
        %v711 = vrot.slane %v710, 2
        %v712 = vadd.f32 %v710, %v711
        %v713 = vrot.slane %v712, 1
        %v714 = vadd.f32 %v712, %v713
        %715 = vset.pattern.permute.xlu0 15
        %716 = vperm.xlu0 %715, %v497
        %v717 = vpop.permute.xlu0 %716
        %719 = vset.pattern.permute.xlu0 15
        %720 = vperm.xlu0 %719, %v502
        %v721 = vpop.permute.xlu0 %720
        %v723 = vmul.f32 %v509, %v717
        %v724 = vmul.f32 %v510, %v717
        %v725 = vmul.f32 %v511, %v721
        %v726 = vmul.f32 %v512, %v721
        %v727 = vadd.f32 %v723, %v725
        %v728 = vrot.slane %v727, 4
        %v729 = vadd.f32 %v727, %v728
        %v730 = vrot.slane %v729, 2
        %v731 = vadd.f32 %v729, %v730
        %v732 = vrot.slane %v731, 1
        %v733 = vadd.f32 %v731, %v732
        %v734 = vadd.f32 %v724, %v726
        %v735 = vrot.slane %v734, 4
        %v736 = vadd.f32 %v734, %v735
        %v737 = vrot.slane %v736, 2
        %v738 = vadd.f32 %v736, %v737
        %v739 = vrot.slane %v738, 1
        %v740 = vadd.f32 %v738, %v739
        %v741 = vadd.f32 %v592, 1e-06
        %v742 = vadd.f32 %v594, 1e-06
        %v743 = vrcp.pop %v741
        %v744 = vmul.f32 %v689, %v743
        %v745 = vrcp.pop %v742
        %v746 = vmul.f32 %v696, %v745
        %v747 = vmul.f32 %v744, 6.2831855
        %v748 = vmul.f32 %v746, 6.2831855
        %v749 = vadd.f32 %v733, 1e-06
        %v750 = vadd.f32 %v740, 1e-06
        %v751 = vrcp.pop %v749
        %v752 = vmul.f32 %v707, %v751
        %v753 = vrcp.pop %v750
        %v754 = vmul.f32 %v714, %v753
        %v755 = vmul.f32 %v752, 6.2831855
        %v756 = vmul.f32 %v754, 6.2831855
        %v757 = vld [vmem:[%s5] sm:$0xff]
        %v758 = vld [vmem:[%s5 + $0x8] sm:$0xff]
        %v759 = vld [vmem:[%s6] sm:$0xff]
        %v760 = vld [vmem:[%s6 + $0x8] sm:$0xff]
        %v761 = vlaneseq
        %v762 = vshrl.u32 %v761, 7
        %v763 = vsub.s32 7, %v762
        %v764 = vrot.slane %v747, %v763
        %v765 = vlaneseq
        %v766 = vshrl.u32 %v765, 7
        %v767 = vsub.s32 7, %v766
        %v768 = vrot.slane %v748, %v767
        %770 = vset.pattern.permute.xlu0 0
        %771 = vperm.xlu0 %770, %v757
        %v772 = vpop.permute.xlu0 %771
        %775 = vset.pattern.permute.xlu0 0
        %776 = vperm.xlu0 %775, %v758
        %v777 = vpop.permute.xlu0 %776
        %v779 = vmul.f32 %v764, %v772
        %v780 = vmul.f32 %v768, %v772
        %v781 = vmul.f32 %v764, %v777
        %v782 = vmul.f32 %v768, %v777
        %784 = vset.pattern.permute.xlu0 0
        %785 = vperm.xlu0 %784, %v759
        %v786 = vpop.permute.xlu0 %785
        %789 = vset.pattern.permute.xlu0 0
        %790 = vperm.xlu0 %789, %v760
        %v791 = vpop.permute.xlu0 %790
        %v793 = vadd.f32 %v779, %v786
        %v794 = vadd.f32 %v780, %v786
        %v795 = vadd.f32 %v781, %v791
        %v796 = vadd.f32 %v782, %v791
        %v797 = vand.u32 2147483647, %v793
        %vm798 = vcmp.le.f32.partialorder %v797, 0.7853982
        %vm799 = vcmp.lt.s32.totalorder %v793, 0
        %v800 = vand.u32 %v793, 2139095040
        %v801 = vshrl.u32 %v800, 23
        %v802 = vsub.s32 %v801, 127
        %v803 = vand.u32 2147483647, %v793
        %v804 = vand.u32 %v803, 8388607
        %v805 = vor.u32 %v804, 8388608
        %v806 = vsub.s32 0, %v805
        %v807 = vadd.s32 %v802, 1
        %vm808 = vcmp.gt.s32.totalorder %v807, 0
        %v809 = vsel %vm808, %v807, 0
        %v810 = vshrl.u32 %v809, 5
        %v811 = vand.u32 %v809, 31
        %v812 = vsub.s32 32, %v811
        %v813 = vshrl.u32 683565275, %v812
        %v814 = vshll.u32 683565275, %v811
        %v815 = vshrl.u32 2475754826, %v812
        %v816 = vor.u32 %v814, %v815
        %v817 = vshll.u32 2475754826, %v811
        %v818 = vshrl.u32 2131351028, %v812
        %v819 = vor.u32 %v817, %v818
        %v820 = vshll.u32 2131351028, %v811
        %v821 = vshrl.u32 2102212464, %v812
        %v822 = vor.u32 %v820, %v821
        %v823 = vshll.u32 2102212464, %v811
        %v824 = vshrl.u32 920167782, %v812
        %v825 = vor.u32 %v823, %v824
        %v826 = vshll.u32 920167782, %v811
        %v827 = vshrl.u32 1326507024, %v812
        %v828 = vor.u32 %v826, %v827
        %vm829 = vcmp.lt.s32.totalorder %v810, 1
        %vm830 = vcmp.lt.s32.totalorder %v810, 2
        %vm831 = vcmp.lt.s32.totalorder %v810, 3
        %vm832 = vcmp.lt.s32.totalorder %v810, 4
        %v833 = vsel %vm829, %v813, %v816
        %v834 = vsel %vm832, %v822, 2102212464
        %v835 = vsel %vm831, %v819, %v834
        %v836 = vsel %vm830, %v833, %v835
        %v837 = vsel %vm829, %v816, %v819
        %v838 = vsel %vm832, %v825, 920167782
        %v839 = vsel %vm831, %v822, %v838
        %v840 = vsel %vm830, %v837, %v839
        %v841 = vsel %vm829, %v819, %v822
        %v842 = vsel %vm832, %v828, 1326507024
        %v843 = vsel %vm831, %v825, %v842
        %v844 = vsel %vm830, %v841, %v843
        %v845 = vshll.u32 %v805, 8
        %v846 = vmul.u32.u64.compose %v845, %v844
        %v847 = vextract.low.u32 %v846
        %v848 = vextract.high.u32 %v846
        %v849 = vmul.u32.u64.compose %v845, %v840
        %v850 = vextract.low.u32 %v849
        %v851 = vextract.high.u32 %v849
        %v852 = vmul.u32 %v845, %v836
        %v853 = vadd.s32 %v848, %v850
        %vm854 = vc.u32 %v848, %v850
        %v855 = vadd.s32 %v851, 1
        %v856 = vsel %vm854, %v855, %v851
        %v857 = vadd.s32 %v852, %v856
        %v858 = vadd.s32 %v857, 536870912
        %v859 = vshrl.u32 %v858, 30
        %v860 = vshll.u32 %v859, 30
        %v861 = vsub.s32 %v857, %v860
        %vm862 = vcmp.lt.s32.totalorder %v861, 0
        %v863 = vsub.s32 0, %v861
        %v864 = vsel %vm862, %v863, %v861
        %v865 = vclz %v864
        %v866 = vsub.s32 %v865, 2
        %vm867 = vcmp.gt.s32.totalorder 0, %v866
        %v868 = vsel %vm867, 0, %v866
        %v869 = vsub.s32 32, %v868
        %v870 = vshll.u32 %v861, %v868
        %v871 = vshrl.u32 %v853, %v869
        %v872 = vor.u32 %v870, %v871
        %v873 = vsub.s32 4294967266, %v868
        %v874 = vadd.s32 %v873, 127
        %v875 = vshll.u32 %v874, 23
        %v876 = vor.u32 4788187, %v875
        %v877 = vand.u32 2147483647, %v876
        %v879 = vcvt.s32.f32 %v872
        %v880 = vmul.f32 %v879, %v877
        %v881 = vxor.u32 %v880, 2147483648
        %v882 = vsel %vm799, %v881, %v880
        %v883 = vsub.s32 4, %v859
        %v884 = vsel %vm799, %v883, %v859
        %v885 = vsel %vm798, %v793, %v882
        %v886 = vsel %vm798, 0, %v884
        %v887 = vcosq.f32.pop %v885
        %v888 = vsinq.f32.pop %v885
        %vm889 = vweird.f32 %v793
        %v890 = vadd.s32 %v886, 3
        %v891 = vand.u32 %v890, 3
        %vm892 = vcmp.lt.s32.totalorder %v891, 2
        %vm893 = vcmp.eq.s32.totalorder %v891, 0
        %v894 = vxor.u32 %v888, 2147483648
        %v895 = vsel %vm893, %v887, %v894
        %vm896 = vcmp.eq.s32.totalorder %v891, 2
        %v897 = vxor.u32 %v887, 2147483648
        %v898 = vsel %vm896, %v897, %v888
        %v899 = vsel %vm892, %v895, %v898
        %v900 = vsel %vm889, nan, %v899
        %v901 = vand.u32 2147483647, %v794
        %vm902 = vcmp.le.f32.partialorder %v901, 0.7853982
        %vm903 = vcmp.lt.s32.totalorder %v794, 0
        %v904 = vand.u32 %v794, 2139095040
        %v905 = vshrl.u32 %v904, 23
        %v906 = vsub.s32 %v905, 127
        %v907 = vand.u32 2147483647, %v794
        %v908 = vand.u32 %v907, 8388607
        %v909 = vor.u32 %v908, 8388608
        %v910 = vsub.s32 0, %v909
        %v911 = vadd.s32 %v906, 1
        %vm912 = vcmp.gt.s32.totalorder %v911, 0
        %v913 = vsel %vm912, %v911, 0
        %v914 = vshrl.u32 %v913, 5
        %v915 = vand.u32 %v913, 31
        %v916 = vsub.s32 32, %v915
        %v917 = vshrl.u32 683565275, %v916
        %v918 = vshll.u32 683565275, %v915
        %v919 = vshrl.u32 2475754826, %v916
        %v920 = vor.u32 %v918, %v919
        %v921 = vshll.u32 2475754826, %v915
        %v922 = vshrl.u32 2131351028, %v916
        %v923 = vor.u32 %v921, %v922
        %v924 = vshll.u32 2131351028, %v915
        %v925 = vshrl.u32 2102212464, %v916
        %v926 = vor.u32 %v924, %v925
        %v927 = vshll.u32 2102212464, %v915
        %v928 = vshrl.u32 920167782, %v916
        %v929 = vor.u32 %v927, %v928
        %v930 = vshll.u32 920167782, %v915
        %v931 = vshrl.u32 1326507024, %v916
        %v932 = vor.u32 %v930, %v931
        %vm933 = vcmp.lt.s32.totalorder %v914, 1
        %vm934 = vcmp.lt.s32.totalorder %v914, 2
        %vm935 = vcmp.lt.s32.totalorder %v914, 3
        %vm936 = vcmp.lt.s32.totalorder %v914, 4
        %v937 = vsel %vm933, %v917, %v920
        %v938 = vsel %vm936, %v926, 2102212464
        %v939 = vsel %vm935, %v923, %v938
        %v940 = vsel %vm934, %v937, %v939
        %v941 = vsel %vm933, %v920, %v923
        %v942 = vsel %vm936, %v929, 920167782
        %v943 = vsel %vm935, %v926, %v942
        %v944 = vsel %vm934, %v941, %v943
        %v945 = vsel %vm933, %v923, %v926
        %v946 = vsel %vm936, %v932, 1326507024
        %v947 = vsel %vm935, %v929, %v946
        %v948 = vsel %vm934, %v945, %v947
        %v949 = vshll.u32 %v909, 8
        %v950 = vmul.u32.u64.compose %v949, %v948
        %v951 = vextract.low.u32 %v950
        %v952 = vextract.high.u32 %v950
        %v953 = vmul.u32.u64.compose %v949, %v944
        %v954 = vextract.low.u32 %v953
        %v955 = vextract.high.u32 %v953
        %v956 = vmul.u32 %v949, %v940
        %v957 = vadd.s32 %v952, %v954
        %vm958 = vc.u32 %v952, %v954
        %v959 = vadd.s32 %v955, 1
        %v960 = vsel %vm958, %v959, %v955
        %v961 = vadd.s32 %v956, %v960
        %v962 = vadd.s32 %v961, 536870912
        %v963 = vshrl.u32 %v962, 30
        %v964 = vshll.u32 %v963, 30
        %v965 = vsub.s32 %v961, %v964
        %vm966 = vcmp.lt.s32.totalorder %v965, 0
        %v967 = vsub.s32 0, %v965
        %v968 = vsel %vm966, %v967, %v965
        %v969 = vclz %v968
        %v970 = vsub.s32 %v969, 2
        %vm971 = vcmp.gt.s32.totalorder 0, %v970
        %v972 = vsel %vm971, 0, %v970
        %v973 = vsub.s32 32, %v972
        %v974 = vshll.u32 %v965, %v972
        %v975 = vshrl.u32 %v957, %v973
        %v976 = vor.u32 %v974, %v975
        %v977 = vsub.s32 4294967266, %v972
        %v978 = vadd.s32 %v977, 127
        %v979 = vshll.u32 %v978, 23
        %v980 = vor.u32 4788187, %v979
        %v981 = vand.u32 2147483647, %v980
        %v983 = vcvt.s32.f32 %v976
        %v984 = vmul.f32 %v983, %v981
        %v985 = vxor.u32 %v984, 2147483648
        %v986 = vsel %vm903, %v985, %v984
        %v987 = vsub.s32 4, %v963
        %v988 = vsel %vm903, %v987, %v963
        %v989 = vsel %vm902, %v794, %v986
        %v990 = vsel %vm902, 0, %v988
        %v991 = vcosq.f32.pop %v989
        %v992 = vsinq.f32.pop %v989
        %vm993 = vweird.f32 %v794
        %v994 = vadd.s32 %v990, 3
        %v995 = vand.u32 %v994, 3
        %vm996 = vcmp.lt.s32.totalorder %v995, 2
        %vm997 = vcmp.eq.s32.totalorder %v995, 0
        %v998 = vxor.u32 %v992, 2147483648
        %v999 = vsel %vm997, %v991, %v998
        %vm1000 = vcmp.eq.s32.totalorder %v995, 2
        %v1001 = vxor.u32 %v991, 2147483648
        %v1002 = vsel %vm1000, %v1001, %v992
        %v1003 = vsel %vm996, %v999, %v1002
        %v1004 = vsel %vm993, nan, %v1003
        %v1005 = vand.u32 2147483647, %v795
        %vm1006 = vcmp.le.f32.partialorder %v1005, 0.7853982
        %vm1007 = vcmp.lt.s32.totalorder %v795, 0
        %v1008 = vand.u32 %v795, 2139095040
        %v1009 = vshrl.u32 %v1008, 23
        %v1010 = vsub.s32 %v1009, 127
        %v1011 = vand.u32 2147483647, %v795
        %v1012 = vand.u32 %v1011, 8388607
        %v1013 = vor.u32 %v1012, 8388608
        %v1014 = vsub.s32 0, %v1013
        %v1015 = vadd.s32 %v1010, 1
        %vm1016 = vcmp.gt.s32.totalorder %v1015, 0
        %v1017 = vsel %vm1016, %v1015, 0
        %v1018 = vshrl.u32 %v1017, 5
        %v1019 = vand.u32 %v1017, 31
        %v1020 = vsub.s32 32, %v1019
        %v1021 = vshrl.u32 683565275, %v1020
        %v1022 = vshll.u32 683565275, %v1019
        %v1023 = vshrl.u32 2475754826, %v1020
        %v1024 = vor.u32 %v1022, %v1023
        %v1025 = vshll.u32 2475754826, %v1019
        %v1026 = vshrl.u32 2131351028, %v1020
        %v1027 = vor.u32 %v1025, %v1026
        %v1028 = vshll.u32 2131351028, %v1019
        %v1029 = vshrl.u32 2102212464, %v1020
        %v1030 = vor.u32 %v1028, %v1029
        %v1031 = vshll.u32 2102212464, %v1019
        %v1032 = vshrl.u32 920167782, %v1020
        %v1033 = vor.u32 %v1031, %v1032
        %v1034 = vshll.u32 920167782, %v1019
        %v1035 = vshrl.u32 1326507024, %v1020
        %v1036 = vor.u32 %v1034, %v1035
        %vm1037 = vcmp.lt.s32.totalorder %v1018, 1
        %vm1038 = vcmp.lt.s32.totalorder %v1018, 2
        %vm1039 = vcmp.lt.s32.totalorder %v1018, 3
        %vm1040 = vcmp.lt.s32.totalorder %v1018, 4
        %v1041 = vsel %vm1037, %v1021, %v1024
        %v1042 = vsel %vm1040, %v1030, 2102212464
        %v1043 = vsel %vm1039, %v1027, %v1042
        %v1044 = vsel %vm1038, %v1041, %v1043
        %v1045 = vsel %vm1037, %v1024, %v1027
        %v1046 = vsel %vm1040, %v1033, 920167782
        %v1047 = vsel %vm1039, %v1030, %v1046
        %v1048 = vsel %vm1038, %v1045, %v1047
        %v1049 = vsel %vm1037, %v1027, %v1030
        %v1050 = vsel %vm1040, %v1036, 1326507024
        %v1051 = vsel %vm1039, %v1033, %v1050
        %v1052 = vsel %vm1038, %v1049, %v1051
        %v1053 = vshll.u32 %v1013, 8
        %v1054 = vmul.u32.u64.compose %v1053, %v1052
        %v1055 = vextract.low.u32 %v1054
        %v1056 = vextract.high.u32 %v1054
        %v1057 = vmul.u32.u64.compose %v1053, %v1048
        %v1058 = vextract.low.u32 %v1057
        %v1059 = vextract.high.u32 %v1057
        %v1060 = vmul.u32 %v1053, %v1044
        %v1061 = vadd.s32 %v1056, %v1058
        %vm1062 = vc.u32 %v1056, %v1058
        %v1063 = vadd.s32 %v1059, 1
        %v1064 = vsel %vm1062, %v1063, %v1059
        %v1065 = vadd.s32 %v1060, %v1064
        %v1066 = vadd.s32 %v1065, 536870912
        %v1067 = vshrl.u32 %v1066, 30
        %v1068 = vshll.u32 %v1067, 30
        %v1069 = vsub.s32 %v1065, %v1068
        %vm1070 = vcmp.lt.s32.totalorder %v1069, 0
        %v1071 = vsub.s32 0, %v1069
        %v1072 = vsel %vm1070, %v1071, %v1069
        %v1073 = vclz %v1072
        %v1074 = vsub.s32 %v1073, 2
        %vm1075 = vcmp.gt.s32.totalorder 0, %v1074
        %v1076 = vsel %vm1075, 0, %v1074
        %v1077 = vsub.s32 32, %v1076
        %v1078 = vshll.u32 %v1069, %v1076
        %v1079 = vshrl.u32 %v1061, %v1077
        %v1080 = vor.u32 %v1078, %v1079
        %v1081 = vsub.s32 4294967266, %v1076
        %v1082 = vadd.s32 %v1081, 127
        %v1083 = vshll.u32 %v1082, 23
        %v1084 = vor.u32 4788187, %v1083
        %v1085 = vand.u32 2147483647, %v1084
        %v1087 = vcvt.s32.f32 %v1080
        %v1088 = vmul.f32 %v1087, %v1085
        %v1089 = vxor.u32 %v1088, 2147483648
        %v1090 = vsel %vm1007, %v1089, %v1088
        %v1091 = vsub.s32 4, %v1067
        %v1092 = vsel %vm1007, %v1091, %v1067
        %v1093 = vsel %vm1006, %v795, %v1090
        %v1094 = vsel %vm1006, 0, %v1092
        %v1095 = vcosq.f32.pop %v1093
        %v1096 = vsinq.f32.pop %v1093
        %vm1097 = vweird.f32 %v795
        %v1098 = vadd.s32 %v1094, 3
        %v1099 = vand.u32 %v1098, 3
        %vm1100 = vcmp.lt.s32.totalorder %v1099, 2
        %vm1101 = vcmp.eq.s32.totalorder %v1099, 0
        %v1102 = vxor.u32 %v1096, 2147483648
        %v1103 = vsel %vm1101, %v1095, %v1102
        %vm1104 = vcmp.eq.s32.totalorder %v1099, 2
        %v1105 = vxor.u32 %v1095, 2147483648
        %v1106 = vsel %vm1104, %v1105, %v1096
        %v1107 = vsel %vm1100, %v1103, %v1106
        %v1108 = vsel %vm1097, nan, %v1107
        %v1109 = vand.u32 2147483647, %v796
        %vm1110 = vcmp.le.f32.partialorder %v1109, 0.7853982
        %vm1111 = vcmp.lt.s32.totalorder %v796, 0
        %v1112 = vand.u32 %v796, 2139095040
        %v1113 = vshrl.u32 %v1112, 23
        %v1114 = vsub.s32 %v1113, 127
        %v1115 = vand.u32 2147483647, %v796
        %v1116 = vand.u32 %v1115, 8388607
        %v1117 = vor.u32 %v1116, 8388608
        %v1118 = vsub.s32 0, %v1117
        %v1119 = vadd.s32 %v1114, 1
        %vm1120 = vcmp.gt.s32.totalorder %v1119, 0
        %v1121 = vsel %vm1120, %v1119, 0
        %v1122 = vshrl.u32 %v1121, 5
        %v1123 = vand.u32 %v1121, 31
        %v1124 = vsub.s32 32, %v1123
        %v1125 = vshrl.u32 683565275, %v1124
        %v1126 = vshll.u32 683565275, %v1123
        %v1127 = vshrl.u32 2475754826, %v1124
        %v1128 = vor.u32 %v1126, %v1127
        %v1129 = vshll.u32 2475754826, %v1123
        %v1130 = vshrl.u32 2131351028, %v1124
        %v1131 = vor.u32 %v1129, %v1130
        %v1132 = vshll.u32 2131351028, %v1123
        %v1133 = vshrl.u32 2102212464, %v1124
        %v1134 = vor.u32 %v1132, %v1133
        %v1135 = vshll.u32 2102212464, %v1123
        %v1136 = vshrl.u32 920167782, %v1124
        %v1137 = vor.u32 %v1135, %v1136
        %v1138 = vshll.u32 920167782, %v1123
        %v1139 = vshrl.u32 1326507024, %v1124
        %v1140 = vor.u32 %v1138, %v1139
        %vm1141 = vcmp.lt.s32.totalorder %v1122, 1
        %vm1142 = vcmp.lt.s32.totalorder %v1122, 2
        %vm1143 = vcmp.lt.s32.totalorder %v1122, 3
        %vm1144 = vcmp.lt.s32.totalorder %v1122, 4
        %v1145 = vsel %vm1141, %v1125, %v1128
        %v1146 = vsel %vm1144, %v1134, 2102212464
        %v1147 = vsel %vm1143, %v1131, %v1146
        %v1148 = vsel %vm1142, %v1145, %v1147
        %v1149 = vsel %vm1141, %v1128, %v1131
        %v1150 = vsel %vm1144, %v1137, 920167782
        %v1151 = vsel %vm1143, %v1134, %v1150
        %v1152 = vsel %vm1142, %v1149, %v1151
        %v1153 = vsel %vm1141, %v1131, %v1134
        %v1154 = vsel %vm1144, %v1140, 1326507024
        %v1155 = vsel %vm1143, %v1137, %v1154
        %v1156 = vsel %vm1142, %v1153, %v1155
        %v1157 = vshll.u32 %v1117, 8
        %v1158 = vmul.u32.u64.compose %v1157, %v1156
        %v1159 = vextract.low.u32 %v1158
        %v1160 = vextract.high.u32 %v1158
        %v1161 = vmul.u32.u64.compose %v1157, %v1152
        %v1162 = vextract.low.u32 %v1161
        %v1163 = vextract.high.u32 %v1161
        %v1164 = vmul.u32 %v1157, %v1148
        %v1165 = vadd.s32 %v1160, %v1162
        %vm1166 = vc.u32 %v1160, %v1162
        %v1167 = vadd.s32 %v1163, 1
        %v1168 = vsel %vm1166, %v1167, %v1163
        %v1169 = vadd.s32 %v1164, %v1168
        %v1170 = vadd.s32 %v1169, 536870912
        %v1171 = vshrl.u32 %v1170, 30
        %v1172 = vshll.u32 %v1171, 30
        %v1173 = vsub.s32 %v1169, %v1172
        %vm1174 = vcmp.lt.s32.totalorder %v1173, 0
        %v1175 = vsub.s32 0, %v1173
        %v1176 = vsel %vm1174, %v1175, %v1173
        %v1177 = vclz %v1176
        %v1178 = vsub.s32 %v1177, 2
        %vm1179 = vcmp.gt.s32.totalorder 0, %v1178
        %v1180 = vsel %vm1179, 0, %v1178
        %v1181 = vsub.s32 32, %v1180
        %v1182 = vshll.u32 %v1173, %v1180
        %v1183 = vshrl.u32 %v1165, %v1181
        %v1184 = vor.u32 %v1182, %v1183
        %v1185 = vsub.s32 4294967266, %v1180
        %v1186 = vadd.s32 %v1185, 127
        %v1187 = vshll.u32 %v1186, 23
        %v1188 = vor.u32 4788187, %v1187
        %v1189 = vand.u32 2147483647, %v1188
        %v1191 = vcvt.s32.f32 %v1184
        %v1192 = vmul.f32 %v1191, %v1189
        %v1193 = vxor.u32 %v1192, 2147483648
        %v1194 = vsel %vm1111, %v1193, %v1192
        %v1195 = vsub.s32 4, %v1171
        %v1196 = vsel %vm1111, %v1195, %v1171
        %v1197 = vsel %vm1110, %v796, %v1194
        %v1198 = vsel %vm1110, 0, %v1196
        %v1199 = vcosq.f32.pop %v1197
        %v1200 = vsinq.f32.pop %v1197
        %vm1201 = vweird.f32 %v796
        %v1202 = vadd.s32 %v1198, 3
        %v1203 = vand.u32 %v1202, 3
        %vm1204 = vcmp.lt.s32.totalorder %v1203, 2
        %vm1205 = vcmp.eq.s32.totalorder %v1203, 0
        %v1206 = vxor.u32 %v1200, 2147483648
        %v1207 = vsel %vm1205, %v1199, %v1206
        %vm1208 = vcmp.eq.s32.totalorder %v1203, 2
        %v1209 = vxor.u32 %v1199, 2147483648
        %v1210 = vsel %vm1208, %v1209, %v1200
        %v1211 = vsel %vm1204, %v1207, %v1210
        %v1212 = vsel %vm1201, nan, %v1211
        %1213 = vst [vmem:[%s330] sm:$0xff] %v900
        %1214 = vst [vmem:[%s330 + $0x8] sm:$0xff] %v1004
        %1215 = vst [vmem:[%s330 + $0x10] sm:$0xff] %v1108
        %1216 = vst [vmem:[%s330 + $0x18] sm:$0xff] %v1212
        %v1217 = vmul.f32 %v755, %v772
        %v1218 = vmul.f32 %v756, %v772
        %v1219 = vmul.f32 %v755, %v777
        %v1220 = vmul.f32 %v756, %v777
        %v1221 = vadd.f32 %v1217, %v786
        %v1222 = vadd.f32 %v1218, %v786
        %v1223 = vadd.f32 %v1219, %v791
        %v1224 = vadd.f32 %v1220, %v791
        %v1225 = vand.u32 2147483647, %v1221
        %vm1226 = vcmp.le.f32.partialorder %v1225, 0.7853982
        %vm1227 = vcmp.lt.s32.totalorder %v1221, 0
        %v1228 = vand.u32 %v1221, 2139095040
        %v1229 = vshrl.u32 %v1228, 23
        %v1230 = vsub.s32 %v1229, 127
        %v1231 = vand.u32 2147483647, %v1221
        %v1232 = vand.u32 %v1231, 8388607
        %v1233 = vor.u32 %v1232, 8388608
        %v1234 = vsub.s32 0, %v1233
        %v1235 = vadd.s32 %v1230, 1
        %vm1236 = vcmp.gt.s32.totalorder %v1235, 0
        %v1237 = vsel %vm1236, %v1235, 0
        %v1238 = vshrl.u32 %v1237, 5
        %v1239 = vand.u32 %v1237, 31
        %v1240 = vsub.s32 32, %v1239
        %v1241 = vshrl.u32 683565275, %v1240
        %v1242 = vshll.u32 683565275, %v1239
        %v1243 = vshrl.u32 2475754826, %v1240
        %v1244 = vor.u32 %v1242, %v1243
        %v1245 = vshll.u32 2475754826, %v1239
        %v1246 = vshrl.u32 2131351028, %v1240
        %v1247 = vor.u32 %v1245, %v1246
        %v1248 = vshll.u32 2131351028, %v1239
        %v1249 = vshrl.u32 2102212464, %v1240
        %v1250 = vor.u32 %v1248, %v1249
        %v1251 = vshll.u32 2102212464, %v1239
        %v1252 = vshrl.u32 920167782, %v1240
        %v1253 = vor.u32 %v1251, %v1252
        %v1254 = vshll.u32 920167782, %v1239
        %v1255 = vshrl.u32 1326507024, %v1240
        %v1256 = vor.u32 %v1254, %v1255
        %vm1257 = vcmp.lt.s32.totalorder %v1238, 1
        %vm1258 = vcmp.lt.s32.totalorder %v1238, 2
        %vm1259 = vcmp.lt.s32.totalorder %v1238, 3
        %vm1260 = vcmp.lt.s32.totalorder %v1238, 4
        %v1261 = vsel %vm1257, %v1241, %v1244
        %v1262 = vsel %vm1260, %v1250, 2102212464
        %v1263 = vsel %vm1259, %v1247, %v1262
        %v1264 = vsel %vm1258, %v1261, %v1263
        %v1265 = vsel %vm1257, %v1244, %v1247
        %v1266 = vsel %vm1260, %v1253, 920167782
        %v1267 = vsel %vm1259, %v1250, %v1266
        %v1268 = vsel %vm1258, %v1265, %v1267
        %v1269 = vsel %vm1257, %v1247, %v1250
        %v1270 = vsel %vm1260, %v1256, 1326507024
        %v1271 = vsel %vm1259, %v1253, %v1270
        %v1272 = vsel %vm1258, %v1269, %v1271
        %v1273 = vshll.u32 %v1233, 8
        %v1274 = vmul.u32.u64.compose %v1273, %v1272
        %v1275 = vextract.low.u32 %v1274
        %v1276 = vextract.high.u32 %v1274
        %v1277 = vmul.u32.u64.compose %v1273, %v1268
        %v1278 = vextract.low.u32 %v1277
        %v1279 = vextract.high.u32 %v1277
        %v1280 = vmul.u32 %v1273, %v1264
        %v1281 = vadd.s32 %v1276, %v1278
        %vm1282 = vc.u32 %v1276, %v1278
        %v1283 = vadd.s32 %v1279, 1
        %v1284 = vsel %vm1282, %v1283, %v1279
        %v1285 = vadd.s32 %v1280, %v1284
        %v1286 = vadd.s32 %v1285, 536870912
        %v1287 = vshrl.u32 %v1286, 30
        %v1288 = vshll.u32 %v1287, 30
        %v1289 = vsub.s32 %v1285, %v1288
        %vm1290 = vcmp.lt.s32.totalorder %v1289, 0
        %v1291 = vsub.s32 0, %v1289
        %v1292 = vsel %vm1290, %v1291, %v1289
        %v1293 = vclz %v1292
        %v1294 = vsub.s32 %v1293, 2
        %vm1295 = vcmp.gt.s32.totalorder 0, %v1294
        %v1296 = vsel %vm1295, 0, %v1294
        %v1297 = vsub.s32 32, %v1296
        %v1298 = vshll.u32 %v1289, %v1296
        %v1299 = vshrl.u32 %v1281, %v1297
        %v1300 = vor.u32 %v1298, %v1299
        %v1301 = vsub.s32 4294967266, %v1296
        %v1302 = vadd.s32 %v1301, 127
        %v1303 = vshll.u32 %v1302, 23
        %v1304 = vor.u32 4788187, %v1303
        %v1305 = vand.u32 2147483647, %v1304
        %v1307 = vcvt.s32.f32 %v1300
        %v1308 = vmul.f32 %v1307, %v1305
        %v1309 = vxor.u32 %v1308, 2147483648
        %v1310 = vsel %vm1227, %v1309, %v1308
        %v1311 = vsub.s32 4, %v1287
        %v1312 = vsel %vm1227, %v1311, %v1287
        %v1313 = vsel %vm1226, %v1221, %v1310
        %v1314 = vsel %vm1226, 0, %v1312
        %v1315 = vcosq.f32.pop %v1313
        %v1316 = vsinq.f32.pop %v1313
        %vm1317 = vweird.f32 %v1221
        %v1318 = vadd.s32 %v1314, 3
        %v1319 = vand.u32 %v1318, 3
        %vm1320 = vcmp.lt.s32.totalorder %v1319, 2
        %vm1321 = vcmp.eq.s32.totalorder %v1319, 0
        %v1322 = vxor.u32 %v1316, 2147483648
        %v1323 = vsel %vm1321, %v1315, %v1322
        %vm1324 = vcmp.eq.s32.totalorder %v1319, 2
        %v1325 = vxor.u32 %v1315, 2147483648
        %v1326 = vsel %vm1324, %v1325, %v1316
        %v1327 = vsel %vm1320, %v1323, %v1326
        %v1328 = vsel %vm1317, nan, %v1327
        %v1329 = vand.u32 2147483647, %v1222
        %vm1330 = vcmp.le.f32.partialorder %v1329, 0.7853982
        %vm1331 = vcmp.lt.s32.totalorder %v1222, 0
        %v1332 = vand.u32 %v1222, 2139095040
        %v1333 = vshrl.u32 %v1332, 23
        %v1334 = vsub.s32 %v1333, 127
        %v1335 = vand.u32 2147483647, %v1222
        %v1336 = vand.u32 %v1335, 8388607
        %v1337 = vor.u32 %v1336, 8388608
        %v1338 = vsub.s32 0, %v1337
        %v1339 = vadd.s32 %v1334, 1
        %vm1340 = vcmp.gt.s32.totalorder %v1339, 0
        %v1341 = vsel %vm1340, %v1339, 0
        %v1342 = vshrl.u32 %v1341, 5
        %v1343 = vand.u32 %v1341, 31
        %v1344 = vsub.s32 32, %v1343
        %v1345 = vshrl.u32 683565275, %v1344
        %v1346 = vshll.u32 683565275, %v1343
        %v1347 = vshrl.u32 2475754826, %v1344
        %v1348 = vor.u32 %v1346, %v1347
        %v1349 = vshll.u32 2475754826, %v1343
        %v1350 = vshrl.u32 2131351028, %v1344
        %v1351 = vor.u32 %v1349, %v1350
        %v1352 = vshll.u32 2131351028, %v1343
        %v1353 = vshrl.u32 2102212464, %v1344
        %v1354 = vor.u32 %v1352, %v1353
        %v1355 = vshll.u32 2102212464, %v1343
        %v1356 = vshrl.u32 920167782, %v1344
        %v1357 = vor.u32 %v1355, %v1356
        %v1358 = vshll.u32 920167782, %v1343
        %v1359 = vshrl.u32 1326507024, %v1344
        %v1360 = vor.u32 %v1358, %v1359
        %vm1361 = vcmp.lt.s32.totalorder %v1342, 1
        %vm1362 = vcmp.lt.s32.totalorder %v1342, 2
        %vm1363 = vcmp.lt.s32.totalorder %v1342, 3
        %vm1364 = vcmp.lt.s32.totalorder %v1342, 4
        %v1365 = vsel %vm1361, %v1345, %v1348
        %v1366 = vsel %vm1364, %v1354, 2102212464
        %v1367 = vsel %vm1363, %v1351, %v1366
        %v1368 = vsel %vm1362, %v1365, %v1367
        %v1369 = vsel %vm1361, %v1348, %v1351
        %v1370 = vsel %vm1364, %v1357, 920167782
        %v1371 = vsel %vm1363, %v1354, %v1370
        %v1372 = vsel %vm1362, %v1369, %v1371
        %v1373 = vsel %vm1361, %v1351, %v1354
        %v1374 = vsel %vm1364, %v1360, 1326507024
        %v1375 = vsel %vm1363, %v1357, %v1374
        %v1376 = vsel %vm1362, %v1373, %v1375
        %v1377 = vshll.u32 %v1337, 8
        %v1378 = vmul.u32.u64.compose %v1377, %v1376
        %v1379 = vextract.low.u32 %v1378
        %v1380 = vextract.high.u32 %v1378
        %v1381 = vmul.u32.u64.compose %v1377, %v1372
        %v1382 = vextract.low.u32 %v1381
        %v1383 = vextract.high.u32 %v1381
        %v1384 = vmul.u32 %v1377, %v1368
        %v1385 = vadd.s32 %v1380, %v1382
        %vm1386 = vc.u32 %v1380, %v1382
        %v1387 = vadd.s32 %v1383, 1
        %v1388 = vsel %vm1386, %v1387, %v1383
        %v1389 = vadd.s32 %v1384, %v1388
        %v1390 = vadd.s32 %v1389, 536870912
        %v1391 = vshrl.u32 %v1390, 30
        %v1392 = vshll.u32 %v1391, 30
        %v1393 = vsub.s32 %v1389, %v1392
        %vm1394 = vcmp.lt.s32.totalorder %v1393, 0
        %v1395 = vsub.s32 0, %v1393
        %v1396 = vsel %vm1394, %v1395, %v1393
        %v1397 = vclz %v1396
        %v1398 = vsub.s32 %v1397, 2
        %vm1399 = vcmp.gt.s32.totalorder 0, %v1398
        %v1400 = vsel %vm1399, 0, %v1398
        %v1401 = vsub.s32 32, %v1400
        %v1402 = vshll.u32 %v1393, %v1400
        %v1403 = vshrl.u32 %v1385, %v1401
        %v1404 = vor.u32 %v1402, %v1403
        %v1405 = vsub.s32 4294967266, %v1400
        %v1406 = vadd.s32 %v1405, 127
        %v1407 = vshll.u32 %v1406, 23
        %v1408 = vor.u32 4788187, %v1407
        %v1409 = vand.u32 2147483647, %v1408
        %v1411 = vcvt.s32.f32 %v1404
        %v1412 = vmul.f32 %v1411, %v1409
        %v1413 = vxor.u32 %v1412, 2147483648
        %v1414 = vsel %vm1331, %v1413, %v1412
        %v1415 = vsub.s32 4, %v1391
        %v1416 = vsel %vm1331, %v1415, %v1391
        %v1417 = vsel %vm1330, %v1222, %v1414
        %v1418 = vsel %vm1330, 0, %v1416
        %v1419 = vcosq.f32.pop %v1417
        %v1420 = vsinq.f32.pop %v1417
        %vm1421 = vweird.f32 %v1222
        %v1422 = vadd.s32 %v1418, 3
        %v1423 = vand.u32 %v1422, 3
        %vm1424 = vcmp.lt.s32.totalorder %v1423, 2
        %vm1425 = vcmp.eq.s32.totalorder %v1423, 0
        %v1426 = vxor.u32 %v1420, 2147483648
        %v1427 = vsel %vm1425, %v1419, %v1426
        %vm1428 = vcmp.eq.s32.totalorder %v1423, 2
        %v1429 = vxor.u32 %v1419, 2147483648
        %v1430 = vsel %vm1428, %v1429, %v1420
        %v1431 = vsel %vm1424, %v1427, %v1430
        %v1432 = vsel %vm1421, nan, %v1431
        %v1433 = vand.u32 2147483647, %v1223
        %vm1434 = vcmp.le.f32.partialorder %v1433, 0.7853982
        %vm1435 = vcmp.lt.s32.totalorder %v1223, 0
        %v1436 = vand.u32 %v1223, 2139095040
        %v1437 = vshrl.u32 %v1436, 23
        %v1438 = vsub.s32 %v1437, 127
        %v1439 = vand.u32 2147483647, %v1223
        %v1440 = vand.u32 %v1439, 8388607
        %v1441 = vor.u32 %v1440, 8388608
        %v1442 = vsub.s32 0, %v1441
        %v1443 = vadd.s32 %v1438, 1
        %vm1444 = vcmp.gt.s32.totalorder %v1443, 0
        %v1445 = vsel %vm1444, %v1443, 0
        %v1446 = vshrl.u32 %v1445, 5
        %v1447 = vand.u32 %v1445, 31
        %v1448 = vsub.s32 32, %v1447
        %v1449 = vshrl.u32 683565275, %v1448
        %v1450 = vshll.u32 683565275, %v1447
        %v1451 = vshrl.u32 2475754826, %v1448
        %v1452 = vor.u32 %v1450, %v1451
        %v1453 = vshll.u32 2475754826, %v1447
        %v1454 = vshrl.u32 2131351028, %v1448
        %v1455 = vor.u32 %v1453, %v1454
        %v1456 = vshll.u32 2131351028, %v1447
        %v1457 = vshrl.u32 2102212464, %v1448
        %v1458 = vor.u32 %v1456, %v1457
        %v1459 = vshll.u32 2102212464, %v1447
        %v1460 = vshrl.u32 920167782, %v1448
        %v1461 = vor.u32 %v1459, %v1460
        %v1462 = vshll.u32 920167782, %v1447
        %v1463 = vshrl.u32 1326507024, %v1448
        %v1464 = vor.u32 %v1462, %v1463
        %vm1465 = vcmp.lt.s32.totalorder %v1446, 1
        %vm1466 = vcmp.lt.s32.totalorder %v1446, 2
        %vm1467 = vcmp.lt.s32.totalorder %v1446, 3
        %vm1468 = vcmp.lt.s32.totalorder %v1446, 4
        %v1469 = vsel %vm1465, %v1449, %v1452
        %v1470 = vsel %vm1468, %v1458, 2102212464
        %v1471 = vsel %vm1467, %v1455, %v1470
        %v1472 = vsel %vm1466, %v1469, %v1471
        %v1473 = vsel %vm1465, %v1452, %v1455
        %v1474 = vsel %vm1468, %v1461, 920167782
        %v1475 = vsel %vm1467, %v1458, %v1474
        %v1476 = vsel %vm1466, %v1473, %v1475
        %v1477 = vsel %vm1465, %v1455, %v1458
        %v1478 = vsel %vm1468, %v1464, 1326507024
        %v1479 = vsel %vm1467, %v1461, %v1478
        %v1480 = vsel %vm1466, %v1477, %v1479
        %v1481 = vshll.u32 %v1441, 8
        %v1482 = vmul.u32.u64.compose %v1481, %v1480
        %v1483 = vextract.low.u32 %v1482
        %v1484 = vextract.high.u32 %v1482
        %v1485 = vmul.u32.u64.compose %v1481, %v1476
        %v1486 = vextract.low.u32 %v1485
        %v1487 = vextract.high.u32 %v1485
        %v1488 = vmul.u32 %v1481, %v1472
        %v1489 = vadd.s32 %v1484, %v1486
        %vm1490 = vc.u32 %v1484, %v1486
        %v1491 = vadd.s32 %v1487, 1
        %v1492 = vsel %vm1490, %v1491, %v1487
        %v1493 = vadd.s32 %v1488, %v1492
        %v1494 = vadd.s32 %v1493, 536870912
        %v1495 = vshrl.u32 %v1494, 30
        %v1496 = vshll.u32 %v1495, 30
        %v1497 = vsub.s32 %v1493, %v1496
        %vm1498 = vcmp.lt.s32.totalorder %v1497, 0
        %v1499 = vsub.s32 0, %v1497
        %v1500 = vsel %vm1498, %v1499, %v1497
        %v1501 = vclz %v1500
        %v1502 = vsub.s32 %v1501, 2
        %vm1503 = vcmp.gt.s32.totalorder 0, %v1502
        %v1504 = vsel %vm1503, 0, %v1502
        %v1505 = vsub.s32 32, %v1504
        %v1506 = vshll.u32 %v1497, %v1504
        %v1507 = vshrl.u32 %v1489, %v1505
        %v1508 = vor.u32 %v1506, %v1507
        %v1509 = vsub.s32 4294967266, %v1504
        %v1510 = vadd.s32 %v1509, 127
        %v1511 = vshll.u32 %v1510, 23
        %v1512 = vor.u32 4788187, %v1511
        %v1513 = vand.u32 2147483647, %v1512
        %v1515 = vcvt.s32.f32 %v1508
        %v1516 = vmul.f32 %v1515, %v1513
        %v1517 = vxor.u32 %v1516, 2147483648
        %v1518 = vsel %vm1435, %v1517, %v1516
        %v1519 = vsub.s32 4, %v1495
        %v1520 = vsel %vm1435, %v1519, %v1495
        %v1521 = vsel %vm1434, %v1223, %v1518
        %v1522 = vsel %vm1434, 0, %v1520
        %v1523 = vcosq.f32.pop %v1521
        %v1524 = vsinq.f32.pop %v1521
        %vm1525 = vweird.f32 %v1223
        %v1526 = vadd.s32 %v1522, 3
        %v1527 = vand.u32 %v1526, 3
        %vm1528 = vcmp.lt.s32.totalorder %v1527, 2
        %vm1529 = vcmp.eq.s32.totalorder %v1527, 0
        %v1530 = vxor.u32 %v1524, 2147483648
        %v1531 = vsel %vm1529, %v1523, %v1530
        %vm1532 = vcmp.eq.s32.totalorder %v1527, 2
        %v1533 = vxor.u32 %v1523, 2147483648
        %v1534 = vsel %vm1532, %v1533, %v1524
        %v1535 = vsel %vm1528, %v1531, %v1534
        %v1536 = vsel %vm1525, nan, %v1535
        %v1537 = vand.u32 2147483647, %v1224
        %vm1538 = vcmp.le.f32.partialorder %v1537, 0.7853982
        %vm1539 = vcmp.lt.s32.totalorder %v1224, 0
        %v1540 = vand.u32 %v1224, 2139095040
        %v1541 = vshrl.u32 %v1540, 23
        %v1542 = vsub.s32 %v1541, 127
        %v1543 = vand.u32 2147483647, %v1224
        %v1544 = vand.u32 %v1543, 8388607
        %v1545 = vor.u32 %v1544, 8388608
        %v1546 = vsub.s32 0, %v1545
        %v1547 = vadd.s32 %v1542, 1
        %vm1548 = vcmp.gt.s32.totalorder %v1547, 0
        %v1549 = vsel %vm1548, %v1547, 0
        %v1550 = vshrl.u32 %v1549, 5
        %v1551 = vand.u32 %v1549, 31
        %v1552 = vsub.s32 32, %v1551
        %v1553 = vshrl.u32 683565275, %v1552
        %v1554 = vshll.u32 683565275, %v1551
        %v1555 = vshrl.u32 2475754826, %v1552
        %v1556 = vor.u32 %v1554, %v1555
        %v1557 = vshll.u32 2475754826, %v1551
        %v1558 = vshrl.u32 2131351028, %v1552
        %v1559 = vor.u32 %v1557, %v1558
        %v1560 = vshll.u32 2131351028, %v1551
        %v1561 = vshrl.u32 2102212464, %v1552
        %v1562 = vor.u32 %v1560, %v1561
        %v1563 = vshll.u32 2102212464, %v1551
        %v1564 = vshrl.u32 920167782, %v1552
        %v1565 = vor.u32 %v1563, %v1564
        %v1566 = vshll.u32 920167782, %v1551
        %v1567 = vshrl.u32 1326507024, %v1552
        %v1568 = vor.u32 %v1566, %v1567
        %vm1569 = vcmp.lt.s32.totalorder %v1550, 1
        %vm1570 = vcmp.lt.s32.totalorder %v1550, 2
        %vm1571 = vcmp.lt.s32.totalorder %v1550, 3
        %vm1572 = vcmp.lt.s32.totalorder %v1550, 4
        %v1573 = vsel %vm1569, %v1553, %v1556
        %v1574 = vsel %vm1572, %v1562, 2102212464
        %v1575 = vsel %vm1571, %v1559, %v1574
        %v1576 = vsel %vm1570, %v1573, %v1575
        %v1577 = vsel %vm1569, %v1556, %v1559
        %v1578 = vsel %vm1572, %v1565, 920167782
        %v1579 = vsel %vm1571, %v1562, %v1578
        %v1580 = vsel %vm1570, %v1577, %v1579
        %v1581 = vsel %vm1569, %v1559, %v1562
        %v1582 = vsel %vm1572, %v1568, 1326507024
        %v1583 = vsel %vm1571, %v1565, %v1582
        %v1584 = vsel %vm1570, %v1581, %v1583
        %v1585 = vshll.u32 %v1545, 8
        %v1586 = vmul.u32.u64.compose %v1585, %v1584
        %v1587 = vextract.low.u32 %v1586
        %v1588 = vextract.high.u32 %v1586
        %v1589 = vmul.u32.u64.compose %v1585, %v1580
        %v1590 = vextract.low.u32 %v1589
        %v1591 = vextract.high.u32 %v1589
        %v1592 = vmul.u32 %v1585, %v1576
        %v1593 = vadd.s32 %v1588, %v1590
        %vm1594 = vc.u32 %v1588, %v1590
        %v1595 = vadd.s32 %v1591, 1
        %v1596 = vsel %vm1594, %v1595, %v1591
        %v1597 = vadd.s32 %v1592, %v1596
        %v1598 = vadd.s32 %v1597, 536870912
        %v1599 = vshrl.u32 %v1598, 30
        %v1600 = vshll.u32 %v1599, 30
        %v1601 = vsub.s32 %v1597, %v1600
        %vm1602 = vcmp.lt.s32.totalorder %v1601, 0
        %v1603 = vsub.s32 0, %v1601
        %v1604 = vsel %vm1602, %v1603, %v1601
        %v1605 = vclz %v1604
        %v1606 = vsub.s32 %v1605, 2
        %vm1607 = vcmp.gt.s32.totalorder 0, %v1606
        %v1608 = vsel %vm1607, 0, %v1606
        %v1609 = vsub.s32 32, %v1608
        %v1610 = vshll.u32 %v1601, %v1608
        %v1611 = vshrl.u32 %v1593, %v1609
        %v1612 = vor.u32 %v1610, %v1611
        %v1613 = vsub.s32 4294967266, %v1608
        %v1614 = vadd.s32 %v1613, 127
        %v1615 = vshll.u32 %v1614, 23
        %v1616 = vor.u32 4788187, %v1615
        %v1617 = vand.u32 2147483647, %v1616
        %v1619 = vcvt.s32.f32 %v1612
        %v1620 = vmul.f32 %v1619, %v1617
        %v1621 = vxor.u32 %v1620, 2147483648
        %v1622 = vsel %vm1539, %v1621, %v1620
        %v1623 = vsub.s32 4, %v1599
        %v1624 = vsel %vm1539, %v1623, %v1599
        %v1625 = vsel %vm1538, %v1224, %v1622
        %v1626 = vsel %vm1538, 0, %v1624
        %v1627 = vcosq.f32.pop %v1625
        %v1628 = vsinq.f32.pop %v1625
        %vm1629 = vweird.f32 %v1224
        %v1630 = vadd.s32 %v1626, 3
        %v1631 = vand.u32 %v1630, 3
        %vm1632 = vcmp.lt.s32.totalorder %v1631, 2
        %vm1633 = vcmp.eq.s32.totalorder %v1631, 0
        %v1634 = vxor.u32 %v1628, 2147483648
        %v1635 = vsel %vm1633, %v1627, %v1634
        %vm1636 = vcmp.eq.s32.totalorder %v1631, 2
        %v1637 = vxor.u32 %v1627, 2147483648
        %v1638 = vsel %vm1636, %v1637, %v1628
        %v1639 = vsel %vm1632, %v1635, %v1638
        %v1640 = vsel %vm1629, nan, %v1639
        %1641 = vst [vmem:[%s330 + $0x20] sm:$0xff] %v1328
        %1642 = vst [vmem:[%s330 + $0x28] sm:$0xff] %v1432
        %1643 = vst [vmem:[%s330 + $0x30] sm:$0xff] %v1536
        %1644 = vst [vmem:[%s330 + $0x38] sm:$0xff] %v1640
        %s1645 = sand.u32 %s184, 1
        %s1646 = scalar_lea.sflag [#allocation4], %s1645
        %s1647 = sand.u32 %s184, 1
        %s1648 = smul.addr %s1647, 64
        %s1649 = scalar_lea.vmem [#allocation10], %s1648
        // Predicated region
        $region65: #{tpu_custom_call.1} parent=47 // pred_check
          %p1650 = pneg %p194
        $region66: #{tpu_custom_call.1} parent=47 // pred_check_branch
          %1652 = sbr.rel (%p1650) target = $region68
        $region67: #{tpu_custom_call.1} parent=47 // pred_region
          %s1654 = ssub.s32 1024, 1024
          %1655 = vsyncadd %s1646, %s1654
          %s1656 = smul.addr %s24, 8
          %s1657 = smul.addr %s1656, 128
          %s1658 = scalar_lea.hbm %s7, %s1657
          %s1659 = sshll.u32 %s1649, 4
          %s1660 = int_to_ptr.vmem [resolvable:$true] %s1659
          %1665 = dma.vmem_to_hbm [thread:$0]  %s1660, 1024, %s1658, %s1646, 256, 256, 16
        $region68: #{tpu_custom_call.1} parent=47 // pred_fallthru
          _
      $region48: #{tpu_custom_call.1} parent=5 // pred_fallthru
        _
      %p1666 = scmp.le.s32.totalorder 2, %s19
      // Predicated region
      $region69: #{tpu_custom_call.1} parent=5 // pred_check
        %p1667 = pneg %p1666
      $region70: #{tpu_custom_call.1} parent=5 // pred_check_branch
        %1669 = sbr.rel (%p1667) target = $region72
      $region71: #{tpu_custom_call.1} parent=5 // pred_region
        %s1670 = ssub.s32 %s19, 2
        // Predicated region
        $region73: #{tpu_custom_call.1} parent=71 // pred_check
          %p1671 = pneg %p200
        $region74: #{tpu_custom_call.1} parent=71 // pred_check_branch
          %1673 = sbr.rel (%p1671) target = $region76
        $region75: #{tpu_custom_call.1} parent=71 // pred_region
          %s1674 = sand.u32 %s185, 1
          %s1675 = scalar_lea.sflag [#allocation4], %s1674
          %s1676 = sand.u32 %s185, 1
          %s1677 = smul.addr %s1676, 64
          %s1678 = scalar_lea.vmem [#allocation10], %s1677
          %1679 = dma.done %s1675, 1024
        $region76: #{tpu_custom_call.1} parent=71 // pred_fallthru
          _
      $region72: #{tpu_custom_call.1} parent=5 // pred_fallthru
        _
    $region6: #{tpu_custom_call.1} parent=1 // loop_footer
      %s23 = sadd.s32 1, %s19
    $region7: #{tpu_custom_call.1} parent=1 // loop_footer_branch
      %18 = sbr.rel target = $region3
    $region8: #{tpu_custom_call.1} parent=1 // loop_exit
      _
    %1680 = vsyncpa [#allocation3], 1
    %s1681 = scalar_lea.sflag [#allocation3], 1
    %1682 = vsyncpa %s1681, 1
    %1683 = vsyncpa [#allocation6], 1
    %1684 = vsyncpa [#allocation9], 1
    %1685 = vsyncpa [#allocation4], 1
    %s1686 = scalar_lea.sflag [#allocation4], 1
    %1687 = vsyncpa %s1686, 1

</llo_original>
